<compile_context>
chip_gen: v7x
topology: tpu7x:2x2x1
jax: 0.10.0
libtpu: 0.0.40
codegen_flags: <defaults>
</compile_context>

<pallas_src>
import jax
import jax.numpy as jnp
from jax.experimental import pallas as pl
from jax.experimental.pallas import tpu as pltpu


def _round_up(x: int, m: int) -> int:
    return ((x + m - 1) // m) * m


def _periodic_gram_kernel(bias_ref, u_ref, v_ref, out_ref):
    # bias_ref: SMEM (1,) f32  -> bias = 2*ln(variance) + c*D/2, c = -0.5/lengthscale^2
    # u_ref:    VMEM (tm, KF)  -> (-c/2) * [cos(2*pi*x1/p), sin(2*pi*x1/p), 0-pad]
    # v_ref:    VMEM (KF, tn)  -> [cos(2*pi*x2/p); sin(2*pi*x2/p); 0-pad]  (lane-dense over tn)
    # out_ref:  VMEM (tm, tn)
    s = jax.lax.dot_general(
        u_ref[...], v_ref[...],
        dimension_numbers=(((1,), (0,)), ((), ())),
        preferred_element_type=jnp.float32,
        precision=jax.lax.Precision.HIGHEST,  # full-f32 MXU passes (bf16 1-pass would lose ~1e-2)
    )
    # TODO(synk): optional bf16 exp for v6e/v7x (doubles EUP throughput) once accuracy can be relaxed.
    out_ref[...] = jnp.exp(s + bias_ref[0]).astype(out_ref.dtype)


def periodic_kernel_gram(x1, x2, lengthscale, variance, period, *,
                         tm=512, tn=1024, out_dtype=jnp.float32):
    """Gram matrix of the periodic kernel.

    x1: (N1, D), x2: (N2, D); lengthscale/variance/period are positive scalars.
    Returns (N1, N2) in `out_dtype`.
    """
    n1, d = x1.shape
    n2, d2 = x2.shape
    assert d == d2

    lengthscale = jnp.asarray(lengthscale, jnp.float32)
    variance = jnp.asarray(variance, jnp.float32)
    period = jnp.asarray(period, jnp.float32)

    # ---- O(N*D) feature-map preprocessing (done once in the wrapper) ----
    two_pi_over_p = (2.0 * jnp.pi) / period
    a1 = x1.astype(jnp.float32) * two_pi_over_p                       # (N1, D)
    a2 = x2.astype(jnp.float32) * two_pi_over_p                       # (N2, D)
    c = -0.5 / (lengthscale * lengthscale)                            # scalar, < 0
    u = jnp.concatenate([jnp.cos(a1), jnp.sin(a1)], axis=-1) * (-0.5 * c)   # (N1, 2D)
    v = jnp.concatenate([jnp.cos(a2), jnp.sin(a2)], axis=-1)                # (N2, 2D)
    bias = (2.0 * jnp.log(variance) + c * (0.5 * d)).reshape((1,)).astype(jnp.float32)

    # Pad the tiny contraction dim to a sublane multiple; zero features are inert in the dot.
    kf = _round_up(2 * d, 8)
    if kf != 2 * d:
        u = jnp.pad(u, ((0, 0), (0, kf - 2 * d)))
        v = jnp.pad(v, ((0, 0), (0, kf - 2 * d)))
    vt = v.T                                                          # (KF, N2)

    # ---- tiling: clamp to problem size, pad ragged edges, keep stores lane-dense ----
    tm_eff = min(tm, _round_up(n1, 8))
    tn_eff = min(tn, _round_up(n2, 128))
    # v7x megacore: if everything fits in one tile, split rows so grid >= 2 "parallel"
    # tiles and both TensorCores get work (harmless on v5e/v6e, which have 1 TC).
    if (_round_up(n1, tm_eff) // tm_eff) * (_round_up(n2, tn_eff) // tn_eff) == 1 \
            and _round_up(n1, 8) >= 16:
        tm_eff = _round_up(_round_up(n1, 8) // 2, 8)
    n1p = _round_up(n1, tm_eff)
    n2p = _round_up(n2, tn_eff)
    if n1p != n1:
        u = jnp.pad(u, ((0, n1p - n1), (0, 0)))
    if n2p != n2:
        vt = jnp.pad(vt, ((0, 0), (0, n2p - n2)))

    grid = (n1p // tm_eff, n2p // tn_eff)

    cost = pl.CostEstimate(
        flops=2 * kf * n1p * n2p,
        transcendentals=n1p * n2p,
        bytes_accessed=(n1p * n2p * jnp.dtype(out_dtype).itemsize
                        + (n1p + n2p) * kf * 4),
    )

    out = pl.pallas_call(
        _periodic_gram_kernel,
        out_shape=jax.ShapeDtypeStruct((n1p, n2p), out_dtype),
        grid_spec=pltpu.PrefetchScalarGridSpec(
            num_scalar_prefetch=0,
            grid=grid,
            in_specs=[
                pl.BlockSpec(memory_space=pltpu.SMEM),               # bias (1,)
                pl.BlockSpec((tm_eff, kf), lambda i, j: (i, 0)),     # U tile  (tm, KF)
                pl.BlockSpec((kf, tn_eff), lambda i, j: (0, j)),     # V^T tile (KF, tn)
            ],
            out_specs=pl.BlockSpec((tm_eff, tn_eff), lambda i, j: (i, j)),
        ),
        compiler_params=pltpu.CompilerParams(
            dimension_semantics=("parallel", "parallel"),
        ),
        cost_estimate=cost,
    )(bias, u, vt)
    return out[:n1, :n2]


# ---------------- parameter head (plain-JAX glue) ----------------

def init_mlp_params(key, dims):
    """dims = [in, hidden..., out]; deterministic init from the given key."""
    params = []
    for i in range(len(dims) - 1):
        key, kw, kb = jax.random.split(key, 3)
        scale = 1.0 / jnp.sqrt(jnp.float32(dims[i]))
        w = jax.random.uniform(kw, (dims[i], dims[i + 1]), jnp.float32, -scale, scale)
        b = jax.random.uniform(kb, (dims[i + 1],), jnp.float32, -scale, scale)
        params.append((w, b))
    return params


def mlp_forward(params, x):
    # MLP with ReLU between layers, biases enabled; dropout is identity in eval.
    for idx, (w, b) in enumerate(params):
        x = x @ w + b
        if idx < len(params) - 1:
            x = jax.nn.relu(x)
    return x


def periodic_kernel_forward(x1, x2, kernel_embedding, mlp_params):
    """Full PeriodicKernel.forward (STANDARD eval mode)."""
    raw = mlp_forward(mlp_params, kernel_embedding)            # (3,)
    p = jax.nn.softplus(raw).astype(jnp.float32)               # [lengthscale, variance, period]
    lengthscale, variance, period = p[0], p[1], p[2]
    return periodic_kernel_gram(x1, x2, lengthscale, variance, period)


# ---------------- reference (pure JAX, mirrors the PyTorch math) ----------------

def periodic_kernel_reference(x1, x2, kernel_embedding, mlp_params):
    raw = mlp_forward(mlp_params, kernel_embedding)
    p = jax.nn.softplus(raw)
    ls, var, period = p[0], p[1], p[2]
    x1p = x1 / period
    x2p = x2 / period
    x_diff = jnp.abs(x1p[:, None, :] - x2p[None, :, :])         # (N1, N2, D)
    k = jnp.exp(-0.5 * jnp.sin(jnp.pi * x_diff) ** 2 / ls ** 2)
    return var ** 2 * jnp.prod(k, axis=-1)


if __name__ == "__main__":
    key = jax.random.PRNGKey(0)
    k_x1, k_x2, k_emb, k_mlp = jax.random.split(key, 4)

    # Small, non-tile-aligned shapes (exercises padding, clamping and the megacore split).
    N1, N2, D = 300, 200, 5
    kernel_embedding_dim = 16
    dim_hidden_layer_list = [32]

    X1 = jax.random.normal(k_x1, (N1, D), jnp.float32)
    X2 = jax.random.normal(k_x2, (N2, D), jnp.float32)
    kernel_embedding = jax.random.normal(k_emb, (kernel_embedding_dim,), jnp.float32)

    mlp_params = init_mlp_params(
        k_mlp, [kernel_embedding_dim] + dim_hidden_layer_list + [3]
    )

    K = periodic_kernel_forward(X1, X2, kernel_embedding, mlp_params)
    K = jax.block_until_ready(K)

    K_ref = periodic_kernel_reference(X1, X2, kernel_embedding, mlp_params)
    assert K.shape == (N1, N2)
    # Trig-identity + full-f32 MXU path agrees with the direct formula to ~1e-6 typically.
    assert jnp.allclose(K, K_ref, atol=1e-5, rtol=1e-4), "mismatch vs reference"

    print("KERNEL_OK")
</pallas_src>

<mosaic_0001>
module attributes {stable_mosaic.version = 11 : i64} {
  func.func @_periodic_gram_kernel(%arg0: i32, %arg1: i32, %arg2: memref<1xf32, #tpu.memory_space<smem>>, %arg3: memref<152x16xf32, #tpu.memory_space<vmem>>, %arg4: memref<16x256xf32, #tpu.memory_space<vmem>>, %arg5: memref<152x256xf32, #tpu.memory_space<vmem>>) attributes {dimension_semantics = [#tpu.dimension_semantics<parallel>, #tpu.dimension_semantics<parallel>], iteration_bounds = array<i64: 2, 1>, scalar_prefetch = 0 : i64, scratch_operands = 0 : i64, tpu.core_type = #tpu.core_type<tc>, window_params = [{transform_indices = @transform_0, window_bounds = array<i64: 1>}, {transform_indices = @transform_1, window_bounds = array<i64: 152, 16>}, {transform_indices = @transform_2, window_bounds = array<i64: 16, 256>}, {transform_indices = @transform_3, window_bounds = array<i64: 152, 256>}]} {
    %c0 = arith.constant 0 : index
    %c0_0 = arith.constant 0 : index
    %0 = vector.load %arg3[%c0, %c0_0] : memref<152x16xf32, #tpu.memory_space<vmem>>, vector<152x16xf32>
    %c0_1 = arith.constant 0 : index
    %c0_2 = arith.constant 0 : index
    %1 = vector.load %arg4[%c0_1, %c0_2] : memref<16x256xf32, #tpu.memory_space<vmem>>, vector<16x256xf32>
    %cst = arith.constant dense<0.000000e+00> : vector<152x256xf32>
    %2 = tpu.matmul %0, %1, %cst {dimension_numbers = #tpu.dot_dimension_numbers<[1], [0], [0], [1], [0, 0, 1, 1], [], []>, precision = #tpu.contract_precision<fp32>} : vector<152x16xf32>, vector<16x256xf32>, vector<152x256xf32> -> vector<152x256xf32>
    %c0_3 = arith.constant 0 : index
    %3 = memref.load %arg2[%c0_3] : memref<1xf32, #tpu.memory_space<smem>>
    %4 = vector.broadcast %3 : f32 to vector<152x256xf32>
    %5 = arith.addf %2, %4 : vector<152x256xf32>
    %6 = math.exp %5 : vector<152x256xf32>
    %c0_4 = arith.constant 0 : index
    %c0_5 = arith.constant 0 : index
    %7 = vector.load %arg5[%c0_4, %c0_5] : memref<152x256xf32, #tpu.memory_space<vmem>>, vector<152x256xf32>
    tpu.vector_store %arg5[%c0_4, %c0_5], %6 {strides = array<i32>} : memref<152x256xf32, #tpu.memory_space<vmem>>, vector<152x256xf32>,
    return
  }
  func.func @transform_0(%arg0: i32, %arg1: i32) -> i32 {
    %c0_i32 = arith.constant 0 : i32
    %c0_i32_0 = arith.constant 0 : i32
    return %c0_i32 : i32
  }
  func.func @transform_1(%arg0: i32, %arg1: i32) -> (i32, i32) {
    %c0_i32 = arith.constant 0 : i32
    %c0_i32_0 = arith.constant 0 : i32
    return %arg0, %c0_i32 : i32, i32
  }
  func.func @transform_2(%arg0: i32, %arg1: i32) -> (i32, i32) {
    %c0_i32 = arith.constant 0 : i32
    %c0_i32_0 = arith.constant 0 : i32
    return %c0_i32, %arg1 : i32, i32
  }
  func.func @transform_3(%arg0: i32, %arg1: i32) -> (i32, i32) {
    %c0_i32 = arith.constant 0 : i32
    return %arg0, %arg1 : i32, i32
  }
}

</mosaic_0001>

<llo_original>
// kernel: tpu_custom_call.1
$region0: #{tpu_custom_call.1}
  #allocation0 [shape = 'u32[]', space=smem, size = 0x4, offset = 0x4, fixed_abs, tag = 'smem constant byte address 0x4 - core index']
  #allocation1 [shape = 'u32[144,128]{1,0:T(1,128)}', space=vmem, size = 0x12000, scoped, tag = 'internal scratch']
  #allocation2 [shape = 'f32[1]{0:T(128)S(6)}', space=smem, size = 0x200, scoped, tag = 'scoped memory for tpu_custom_call.1']
  %s0 = inlined_call_operand.<no memory space> [shape: f32[1], index: 0, kind: input, shape index: {}]
  %s1 = inlined_call_operand.vmem [shape: f32[304,16], index: 1, kind: input, shape index: {}]
  %s2 = inlined_call_operand.vmem [shape: f32[16,256], index: 2, kind: input, shape index: {}]
  %s3 = inlined_call_operand.hbm [shape: f32[304,256], index: 3, kind: output, shape index: {}]
  %s4 = sld [smem:[#allocation0]]
  $region45: #{tpu_custom_call.1} parent=0
    _
  %s6 = ssub.s32 1, %s4
  %s7 = scalar_select 0, %s6, %s4
  %8 = sst [smem:[#allocation2]] %s0
  $region1: #{tpu_custom_call.1} parent=0
    #allocation3 [shape = 'u8[311296]{0}', space=vmem, size = 0x4c000, scoped, tag = 'output window, operand 0']
    #allocation4 [shape = 's32[2]{0}', space=sflag, size = 0x8, scoped, tag = 'scoped memory for tpu_custom_call.1']
    %9 = vsyncpa [#allocation4], 0
    %s10 = scalar_lea.sflag [#allocation4], 1
    %11 = vsyncpa %s10, 0
    loop: start=0, step=1, limit=4
    $region2: #{tpu_custom_call.1} parent=1 // loop_pre_header
      _
    $region3: #{tpu_custom_call.1} parent=1 // loop_header
      %s13 = sphi 0, %s17
      %p14 = scmp.ge.s32.totalorder %s13, 4
      %s20 = sphi 0, %s32
      %s21 = sphi 0, %s28
      %s22 = sphi 0, %s20
      %s23 = sphi 0, %s21
      %s24 = sphi 0, %s22
      %s25 = sphi 0, %s23
      %s33 = sphi 0, %s33
      %s35 = sphi 0, %s33
      %s36 = sphi 0, %s35
      %s50 = sphi 0, %s36
      %s56 = sphi 0, %s58
      %s59 = sphi 0, %s56
      %s60 = sphi 0, %s59
      %s76 = sphi 0, %s60
      %s82 = sphi 0, %s84
      %s85 = sphi 0, %s82
      %s86 = sphi 0, %s85
      %s102 = sphi 0, %s86
      %s110 = sphi 0, %s112
      %s113 = sphi 0, %s110
      %s114 = sphi 0, %s113
      %s130 = sphi 0, %s114
    $region4: #{tpu_custom_call.1} parent=1 // loop_header_branch
      %16 = sbr.rel (%p14) target = $region8
    $region5: #{tpu_custom_call.1} parent=1 // loop_body
      %s18 = ssub.s32 %s13, 1
      %s19 = ssub.s32 %s13, 2
      %s26 = sadd.s32 1, %s21
      %p27 = scmp.ge.s32.totalorder %s26, 1
      %s28 = scalar_select %p27, 0, %s26
      %s29 = sadd.s32 1, %s20
      %s30 = scalar_select %p27, %s29, %s20
      %p31 = scmp.ge.s32.totalorder %s30, 2
      %s32 = scalar_select %p31, 0, %s30
      %s34 = sadd.s32 %s33, 1
      %p37 = scmp.eq.s32.totalorder %s13, 1
      %p38 = scmp.ne.s32.totalorder %s33, %s35
      %p39 = scmp.eq.s32.totalorder %s13, 0
      %p40 = por %p38, %p39
      %p41 = scmp.ne.s32.totalorder %s33, %s35
      %p42 = scmp.eq.s32.totalorder %s18, 1
      %p43 = por %p41, %p42
      %p44 = scmp.ne.s32.totalorder %s35, %s36
      %p45 = scmp.eq.s32.totalorder %s18, 0
      %p46 = por %p44, %p45
      %p47 = scmp.ne.s32.totalorder %s35, %s36
      %p48 = scmp.eq.s32.totalorder %s19, 1
      %p49 = por %p47, %p48
      %p51 = scmp.ne.s32.totalorder %s36, %s50
      %p52 = scmp.eq.s32.totalorder %s19, 0
      %p53 = por %p51, %p52
      %s54 = ssub.s32 %s20, %s32
      %p55 = scmp.eq.s32.totalorder %s54, 0
      %s57 = sadd.s32 %s56, 1
      %s58 = scalar_select %p55, %s56, %s57
      %p61 = pneg %p55
      %p62 = scmp.eq.s32.totalorder %s13, 1
      %p63 = por %p61, %p62
      %p64 = scmp.ne.s32.totalorder %s56, %s59
      %p65 = scmp.eq.s32.totalorder %s13, 0
      %p66 = por %p64, %p65
      %p67 = scmp.ne.s32.totalorder %s56, %s59
      %p68 = scmp.eq.s32.totalorder %s18, 1
      %p69 = por %p67, %p68
      %p70 = scmp.ne.s32.totalorder %s59, %s60
      %p71 = scmp.eq.s32.totalorder %s18, 0
      %p72 = por %p70, %p71
      %p73 = scmp.ne.s32.totalorder %s59, %s60
      %p74 = scmp.eq.s32.totalorder %s19, 1
      %p75 = por %p73, %p74
      %p77 = scmp.ne.s32.totalorder %s60, %s76
      %p78 = scmp.eq.s32.totalorder %s19, 0
      %p79 = por %p77, %p78
      %s80 = ssub.s32 %s21, %s28
      %p81 = scmp.eq.s32.totalorder %s80, 0
      %s83 = sadd.s32 %s82, 1
      %s84 = scalar_select %p81, %s82, %s83
      %p87 = pneg %p81
      %p88 = scmp.eq.s32.totalorder %s13, 1
      %p89 = por %p87, %p88
      %p90 = scmp.ne.s32.totalorder %s82, %s85
      %p91 = scmp.eq.s32.totalorder %s13, 0
      %p92 = por %p90, %p91
      %p93 = scmp.ne.s32.totalorder %s82, %s85
      %p94 = scmp.eq.s32.totalorder %s18, 1
      %p95 = por %p93, %p94
      %p96 = scmp.ne.s32.totalorder %s85, %s86
      %p97 = scmp.eq.s32.totalorder %s18, 0
      %p98 = por %p96, %p97
      %p99 = scmp.ne.s32.totalorder %s85, %s86
      %p100 = scmp.eq.s32.totalorder %s19, 1
      %p101 = por %p99, %p100
      %p103 = scmp.ne.s32.totalorder %s86, %s102
      %p104 = scmp.eq.s32.totalorder %s19, 0
      %p105 = por %p103, %p104
      %s106 = ssub.s32 %s20, %s32
      %s107 = ssub.s32 %s21, %s28
      %s108 = sor.u32 %s106, %s107
      %p109 = scmp.eq.s32.totalorder %s108, 0
      %s111 = sadd.s32 %s110, 1
      %s112 = scalar_select %p109, %s110, %s111
      %p115 = pneg %p109
      %p116 = scmp.eq.s32.totalorder %s13, 1
      %p117 = por %p115, %p116
      %p118 = scmp.ne.s32.totalorder %s110, %s113
      %p119 = scmp.eq.s32.totalorder %s13, 0
      %p120 = por %p118, %p119
      %p121 = scmp.ne.s32.totalorder %s110, %s113
      %p122 = scmp.eq.s32.totalorder %s18, 1
      %p123 = por %p121, %p122
      %p124 = scmp.ne.s32.totalorder %s113, %s114
      %p125 = scmp.eq.s32.totalorder %s18, 0
      %p126 = por %p124, %p125
      %p127 = scmp.ne.s32.totalorder %s113, %s114
      %p128 = scmp.eq.s32.totalorder %s19, 1
      %p129 = por %p127, %p128
      %p131 = scmp.ne.s32.totalorder %s114, %s130
      %p132 = scmp.eq.s32.totalorder %s19, 0
      %p133 = por %p131, %p132
      %p134 = scmp.le.s32.totalorder 1, %s13
      %p135 = scmp.lt.s32.totalorder %s13, 3
      %p136 = pnand %p134, %p135
      %p137 = pneg %p136
      // Predicated region
      $region9: #{tpu_custom_call.1} parent=5 // pred_check
        _
      $region10: #{tpu_custom_call.1} parent=5 // pred_check_branch
        %139 = sbr.rel (%p136) target = $region12
      $region11: #{tpu_custom_call.1} parent=5 // pred_region
        %s140 = ssub.s32 %s13, 1
        // Predicated region
        $region13: #{tpu_custom_call.1} parent=11 // pred_check
          %p141 = pneg %p46
        $region14: #{tpu_custom_call.1} parent=11 // pred_check_branch
          %143 = sbr.rel (%p141) target = $region16
        $region15: #{tpu_custom_call.1} parent=11 // pred_region
          _
        $region16: #{tpu_custom_call.1} parent=11 // pred_fallthru
          _
        // Predicated region
        $region17: #{tpu_custom_call.1} parent=11 // pred_check
          %p144 = pneg %p98
        $region18: #{tpu_custom_call.1} parent=11 // pred_check_branch
          %146 = sbr.rel (%p144) target = $region20
        $region19: #{tpu_custom_call.1} parent=11 // pred_region
          %s147 = smul.u32 2, %s23
          %p148 = scmp.lt.s32.totalorder %s147, 1
          %s149 = scalar_select %p148, %s147, 1
          %s150 = smul.addr %s149, 8
          %s151 = scalar_lea.vmem %s2, %s150
          %s152 = smul.u32 2, %s23
        $region20: #{tpu_custom_call.1} parent=11 // pred_fallthru
          _
      $region12: #{tpu_custom_call.1} parent=5 // pred_fallthru
        _
      %p153 = scmp.lt.s32.totalorder %s13, 2
      // Predicated region
      $region21: #{tpu_custom_call.1} parent=5 // pred_check
        %p154 = pneg %p153
      $region22: #{tpu_custom_call.1} parent=5 // pred_check_branch
        %156 = sbr.rel (%p154) target = $region24
      $region23: #{tpu_custom_call.1} parent=5 // pred_region
        // Predicated region
        $region25: #{tpu_custom_call.1} parent=23 // pred_check
          %p157 = pneg %p66
        $region26: #{tpu_custom_call.1} parent=23 // pred_check_branch
          %159 = sbr.rel (%p157) target = $region28
        $region27: #{tpu_custom_call.1} parent=23 // pred_region
          %s160 = smul.u32 19, %s20
          %p161 = scmp.lt.s32.totalorder %s160, 37
          %s162 = scalar_select %p161, %s160, 37
          %s163 = smul.addr %s162, 8
          %s164 = scalar_lea.vmem %s1, %s163
          %s165 = smul.u32 19, %s20
        $region28: #{tpu_custom_call.1} parent=23 // pred_fallthru
          _
      $region24: #{tpu_custom_call.1} parent=5 // pred_fallthru
        _
      %p166 = scmp.le.s32.totalorder 1, %s13
      %p167 = scmp.lt.s32.totalorder %s13, 3
      %p168 = pnand %p166, %p167
      %p169 = pneg %p168
      // Predicated region
      $region29: #{tpu_custom_call.1} parent=5 // pred_check
        _
      $region30: #{tpu_custom_call.1} parent=5 // pred_check_branch
        %171 = sbr.rel (%p168) target = $region32
      $region31: #{tpu_custom_call.1} parent=5 // pred_region
        %s172 = ssub.s32 %s13, 1
        %p173 = pneg %p46
        %p174 = pneg %p43
        %s175 = smul.u32 19, %s22
        %p176 = scmp.lt.s32.totalorder %s175, 37
        %s177 = scalar_select %p176, %s175, 37
        %s178 = smul.addr %s177, 8
        %s179 = scalar_lea.vmem %s1, %s178
        %p180 = pneg %p72
        %p181 = pneg %p69
        %s182 = smul.u32 2, %s23
        %p183 = scmp.lt.s32.totalorder %s182, 1
        %s184 = scalar_select %p183, %s182, 1
        %s185 = smul.addr %s184, 8
        %s186 = scalar_lea.vmem %s2, %s185
        %p187 = pneg %p98
        %p188 = pneg %p95
        %p189 = pneg %p126
        %p190 = pneg %p123
        %s191 = sand.u32 %s113, 1
        %s192 = scalar_lea.sflag [#allocation4], %s191
        %s193 = sand.u32 %s113, 1
        %s194 = smul.addr %s193, 304
        %s195 = scalar_lea.vmem [#allocation3], %s194
        %s196 = smul.u32 19, %s22
        %p197 = scmp.lt.s32.totalorder %s196, 37
        %s198 = scalar_select %p197, %s196, 37
        %s199 = smul.addr %s198, 8
        %s200 = scalar_lea.vmem %s1, %s199
        %s201 = smul.u32 19, %s22
        %s202 = smul.u32 2, %s23
        %p203 = scmp.lt.s32.totalorder %s202, 1
        %s204 = scalar_select %p203, %s202, 1
        %s205 = smul.addr %s204, 8
        %s206 = scalar_lea.vmem %s2, %s205
        %s207 = smul.u32 2, %s23
        %s208 = smul.u32 19, %s22
        %s209 = smul.u32 2, %s23
        %v210 = vld [vmem:[%s200] sm:$0xff]
        %v211 = vld [vmem:[%s200 + $0x8] sm:$0xff]
        %v212 = vld [vmem:[%s200 + $0x10] sm:$0xff]
        %v213 = vld [vmem:[%s200 + $0x18] sm:$0xff]
        %v214 = vld [vmem:[%s200 + $0x20] sm:$0xff]
        %v215 = vld [vmem:[%s200 + $0x28] sm:$0xff]
        %v216 = vld [vmem:[%s200 + $0x30] sm:$0xff]
        %v217 = vld [vmem:[%s200 + $0x38] sm:$0xff]
        %v218 = vld [vmem:[%s200 + $0x40] sm:$0xff]
        %v219 = vld [vmem:[%s200 + $0x48] sm:$0xff]
        %v220 = vld [vmem:[%s200 + $0x50] sm:$0xff]
        %v221 = vld [vmem:[%s200 + $0x58] sm:$0xff]
        %v222 = vld [vmem:[%s200 + $0x60] sm:$0xff]
        %v223 = vld [vmem:[%s200 + $0x68] sm:$0xff]
        %v224 = vld [vmem:[%s200 + $0x70] sm:$0xff]
        %v225 = vld [vmem:[%s200 + $0x78] sm:$0xff]
        %v226 = vld [vmem:[%s200 + $0x80] sm:$0xff]
        %v227 = vld [vmem:[%s200 + $0x88] sm:$0xff]
        %v228 = vld [vmem:[%s200 + $0x90] sm:$0xff]
        %v229 = vld [vmem:[%s206] sm:$0xff]
        %v230 = vld [vmem:[%s206 + $0x8] sm:$0xff]
        %v231 = vld [vmem:[%s206 + $0x10] sm:$0xff]
        %v232 = vld [vmem:[%s206 + $0x18] sm:$0xff]
        %s233 = sld [smem:[#allocation2]]
        %v234 = vstv %s233
        %vm235 = vcmask 130048
        %v237 = vsel %vm235, %v210, 0
        %v240 = vsel %vm235, %v211, 0
        %v243 = vsel %vm235, %v212, 0
        %v246 = vsel %vm235, %v213, 0
        %v249 = vsel %vm235, %v214, 0
        %v252 = vsel %vm235, %v215, 0
        %v255 = vsel %vm235, %v216, 0
        %v258 = vsel %vm235, %v217, 0
        %v261 = vsel %vm235, %v218, 0
        %v264 = vsel %vm235, %v219, 0
        %v267 = vsel %vm235, %v220, 0
        %v270 = vsel %vm235, %v221, 0
        %v273 = vsel %vm235, %v222, 0
        %v276 = vsel %vm235, %v223, 0
        %v279 = vsel %vm235, %v224, 0
        %v282 = vsel %vm235, %v225, 0
        %v285 = vsel %vm235, %v226, 0
        %v288 = vsel %vm235, %v227, 0
        %v291 = vsel %vm235, %v228, 0
        %v293 = vand.u32 %v230, 4294901760
        %294 = vmatprep.subr.mxu0 %v293
        %v295 = vand.u32 %v229, 4294901760
        %296 = vmatpush1.msra.mxu0 %v295
        %v297 = vand.u32 %v232, 4294901760
        %298 = vmatprep.subr.mxu0 %v297
        %v299 = vand.u32 %v231, 4294901760
        %300 = vmatpush1.msra.mxu0 %v299
        %301 = vmatprep.subr.mxu0 0.0
        %302 = vmatpush1.msra.mxu0 0.0
        %303 = vmatprep.subr.mxu0 0.0
        %304 = vmatpush1.msra.mxu0 0.0
        %305 = vmatprep.subr.mxu0 0.0
        %306 = vmatpush1.msra.mxu0 0.0
        %307 = vmatprep.subr.mxu0 0.0
        %308 = vmatpush1.msra.mxu0 0.0
        %309 = vmatprep.subr.mxu0 0.0
        %310 = vmatpush1.msra.mxu0 0.0
        %311 = vmatprep.subr.mxu0 0.0
        %312 = vmatpush1.msra.mxu0 0.0
        %313 = vmatprep.subr.mxu0 0.0
        %314 = vmatpush1.msra.mxu0 0.0
        %315 = vmatprep.subr.mxu0 0.0
        %316 = vmatpush1.msra.mxu0 0.0
        %317 = vmatprep.subr.mxu0 0.0
        %318 = vmatpush1.msra.mxu0 0.0
        %319 = vmatprep.subr.mxu0 0.0
        %320 = vmatpush1.msra.mxu0 0.0
        %321 = vmatprep.subr.mxu0 0.0
        %322 = vmatpush1.msra.mxu0 0.0
        %323 = vmatprep.subr.mxu0 0.0
        %324 = vmatpush1.msra.mxu0 0.0
        %325 = vmatprep.subr.mxu0 0.0
        %326 = vmatpush1.msra.mxu0 0.0
        %327 = vmatprep.subr.mxu0 0.0
        %328 = vmatpush1.msra.mxu0 0.0
        %329 = vmatprep.subr.mxu0 0.0
        %330 = vmatpush1.msra.mxu0 0.0
        %331 = vmatprep.subr.mxu0 0.0
        %332 = vmatpush1.msra.mxu0 0.0
        %333 = vmatprep.subr.mxu0 0.0
        %334 = vmatpush1.msra.mxu0 0.0
        %335 = vmatprep.subr.mxu0 0.0
        %336 = vmatpush1.msra.mxu0 0.0
        %337 = vmatprep.subr.mxu0 0.0
        %338 = vmatpush1.msra.mxu0 0.0
        %339 = vmatprep.subr.mxu0 0.0
        %340 = vmatpush1.msra.mxu0 0.0
        %341 = vmatprep.subr.mxu0 0.0
        %342 = vmatpush1.msra.mxu0 0.0
        %343 = vmatprep.subr.mxu0 0.0
        %344 = vmatpush1.msra.mxu0 0.0
        %345 = vmatprep.subr.mxu0 0.0
        %346 = vmatpush1.msra.mxu0 0.0
        %347 = vmatprep.subr.mxu0 0.0
        %348 = vmatpush1.msra.mxu0 0.0
        %349 = vmatprep.subr.mxu0 0.0
        %350 = vmatpush1.msra.mxu0 0.0
        %351 = vmatprep.subr.mxu0 0.0
        %352 = vmatpush1.msra.mxu0 0.0
        %353 = vmatprep.subr.mxu0 0.0
        %354 = vmatpush1.msra.mxu0 0.0
        %355 = vmatprep.subr.mxu0 0.0
        %356 = vmatpush1.msra.mxu0 0.0
        %357 = vmatprep.subr.mxu0 0.0
        %358 = vmatpush1.msra.mxu0 0.0
        %359 = vmatprep.subr.mxu0 0.0
        %360 = vmatpush1.msra.mxu0 0.0
        %361 = vmatprep.mubr.f32.mxu0 0.0
        %v362 = vand.u32 %v237, 4294901760
        %v363 = vsub.f32 %v237, %v362
        %v364 = vand.u32 %v363, 4294901760
        %v365 = vsub.f32 %v363, %v364
        %v366 = vand.u32 %v365, 4294901760
        %367 = vmatmul.mubr.f32.gmra.mrb[0].mxu0 %v366
        %v368 = vpop.f32.mrb[0].mxu0
        %v369 = vadd.f32 %v234, %v368
        %v370 = vpop.f32.mrb[0].mxu0
        %v371 = vadd.f32 %v234, %v370
        %372 = vmatprep.mubr.f32.mxu0 0.0
        %v373 = vand.u32 %v240, 4294901760
        %v374 = vsub.f32 %v240, %v373
        %v375 = vand.u32 %v374, 4294901760
        %v376 = vsub.f32 %v374, %v375
        %v377 = vand.u32 %v376, 4294901760
        %378 = vmatmul.mubr.f32.gmra.mrb[0].mxu0 %v377
        %v379 = vpop.f32.mrb[0].mxu0
        %v380 = vadd.f32 %v234, %v379
        %v381 = vpop.f32.mrb[0].mxu0
        %v382 = vadd.f32 %v234, %v381
        %383 = vmatprep.mubr.f32.mxu0 0.0
        %v384 = vand.u32 %v243, 4294901760
        %v385 = vsub.f32 %v243, %v384
        %v386 = vand.u32 %v385, 4294901760
        %v387 = vsub.f32 %v385, %v386
        %v388 = vand.u32 %v387, 4294901760
        %389 = vmatmul.mubr.f32.gmra.mrb[0].mxu0 %v388
        %v390 = vpop.f32.mrb[0].mxu0
        %v391 = vadd.f32 %v234, %v390
        %v392 = vpop.f32.mrb[0].mxu0
        %v393 = vadd.f32 %v234, %v392
        %394 = vmatprep.mubr.f32.mxu0 0.0
        %v395 = vand.u32 %v246, 4294901760
        %v396 = vsub.f32 %v246, %v395
        %v397 = vand.u32 %v396, 4294901760
        %v398 = vsub.f32 %v396, %v397
        %v399 = vand.u32 %v398, 4294901760
        %400 = vmatmul.mubr.f32.gmra.mrb[0].mxu0 %v399
        %v401 = vpop.f32.mrb[0].mxu0
        %v402 = vadd.f32 %v234, %v401
        %v403 = vpop.f32.mrb[0].mxu0
        %v404 = vadd.f32 %v234, %v403
        %405 = vmatprep.mubr.f32.mxu0 0.0
        %v406 = vand.u32 %v249, 4294901760
        %v407 = vsub.f32 %v249, %v406
        %v408 = vand.u32 %v407, 4294901760
        %v409 = vsub.f32 %v407, %v408
        %v410 = vand.u32 %v409, 4294901760
        %411 = vmatmul.mubr.f32.gmra.mrb[0].mxu0 %v410
        %v412 = vpop.f32.mrb[0].mxu0
        %v413 = vadd.f32 %v234, %v412
        %v414 = vpop.f32.mrb[0].mxu0
        %v415 = vadd.f32 %v234, %v414
        %416 = vmatprep.mubr.f32.mxu0 0.0
        %v417 = vand.u32 %v252, 4294901760
        %v418 = vsub.f32 %v252, %v417
        %v419 = vand.u32 %v418, 4294901760
        %v420 = vsub.f32 %v418, %v419
        %v421 = vand.u32 %v420, 4294901760
        %422 = vmatmul.mubr.f32.gmra.mrb[0].mxu0 %v421
        %v423 = vpop.f32.mrb[0].mxu0
        %v424 = vadd.f32 %v234, %v423
        %v425 = vpop.f32.mrb[0].mxu0
        %v426 = vadd.f32 %v234, %v425
        %427 = vmatprep.mubr.f32.mxu0 0.0
        %v428 = vand.u32 %v255, 4294901760
        %v429 = vsub.f32 %v255, %v428
        %v430 = vand.u32 %v429, 4294901760
        %v431 = vsub.f32 %v429, %v430
        %v432 = vand.u32 %v431, 4294901760
        %433 = vmatmul.mubr.f32.gmra.mrb[0].mxu0 %v432
        %v434 = vpop.f32.mrb[0].mxu0
        %v435 = vadd.f32 %v234, %v434
        %v436 = vpop.f32.mrb[0].mxu0
        %v437 = vadd.f32 %v234, %v436
        %438 = vmatprep.mubr.f32.mxu0 0.0
        %v439 = vand.u32 %v258, 4294901760
        %v440 = vsub.f32 %v258, %v439
        %v441 = vand.u32 %v440, 4294901760
        %v442 = vsub.f32 %v440, %v441
        %v443 = vand.u32 %v442, 4294901760
        %444 = vmatmul.mubr.f32.gmra.mrb[0].mxu0 %v443
        %v445 = vpop.f32.mrb[0].mxu0
        %v446 = vadd.f32 %v234, %v445
        %v447 = vpop.f32.mrb[0].mxu0
        %v448 = vadd.f32 %v234, %v447
        %449 = vmatprep.mubr.f32.mxu0 0.0
        %v450 = vand.u32 %v261, 4294901760
        %v451 = vsub.f32 %v261, %v450
        %v452 = vand.u32 %v451, 4294901760
        %v453 = vsub.f32 %v451, %v452
        %v454 = vand.u32 %v453, 4294901760
        %455 = vmatmul.mubr.f32.gmra.mrb[0].mxu0 %v454
        %v456 = vpop.f32.mrb[0].mxu0
        %v457 = vadd.f32 %v234, %v456
        %v458 = vpop.f32.mrb[0].mxu0
        %v459 = vadd.f32 %v234, %v458
        %460 = vmatprep.mubr.f32.mxu0 0.0
        %v461 = vand.u32 %v264, 4294901760
        %v462 = vsub.f32 %v264, %v461
        %v463 = vand.u32 %v462, 4294901760
        %v464 = vsub.f32 %v462, %v463
        %v465 = vand.u32 %v464, 4294901760
        %466 = vmatmul.mubr.f32.gmra.mrb[0].mxu0 %v465
        %v467 = vpop.f32.mrb[0].mxu0
        %v468 = vadd.f32 %v234, %v467
        %v469 = vpop.f32.mrb[0].mxu0
        %v470 = vadd.f32 %v234, %v469
        %471 = vmatprep.mubr.f32.mxu0 0.0
        %v472 = vand.u32 %v267, 4294901760
        %v473 = vsub.f32 %v267, %v472
        %v474 = vand.u32 %v473, 4294901760
        %v475 = vsub.f32 %v473, %v474
        %v476 = vand.u32 %v475, 4294901760
        %477 = vmatmul.mubr.f32.gmra.mrb[0].mxu0 %v476
        %v478 = vpop.f32.mrb[0].mxu0
        %v479 = vadd.f32 %v234, %v478
        %v480 = vpop.f32.mrb[0].mxu0
        %v481 = vadd.f32 %v234, %v480
        %482 = vmatprep.mubr.f32.mxu0 0.0
        %v483 = vand.u32 %v270, 4294901760
        %v484 = vsub.f32 %v270, %v483
        %v485 = vand.u32 %v484, 4294901760
        %v486 = vsub.f32 %v484, %v485
        %v487 = vand.u32 %v486, 4294901760
        %488 = vmatmul.mubr.f32.gmra.mrb[0].mxu0 %v487
        %v489 = vpop.f32.mrb[0].mxu0
        %v490 = vadd.f32 %v234, %v489
        %v491 = vpop.f32.mrb[0].mxu0
        %v492 = vadd.f32 %v234, %v491
        %493 = vmatprep.mubr.f32.mxu0 0.0
        %v494 = vand.u32 %v273, 4294901760
        %v495 = vsub.f32 %v273, %v494
        %v496 = vand.u32 %v495, 4294901760
        %v497 = vsub.f32 %v495, %v496
        %v498 = vand.u32 %v497, 4294901760
        %499 = vmatmul.mubr.f32.gmra.mrb[0].mxu0 %v498
        %v500 = vpop.f32.mrb[0].mxu0
        %v501 = vadd.f32 %v234, %v500
        %v502 = vpop.f32.mrb[0].mxu0
        %v503 = vadd.f32 %v234, %v502
        %504 = vmatprep.mubr.f32.mxu0 0.0
        %v505 = vand.u32 %v276, 4294901760
        %v506 = vsub.f32 %v276, %v505
        %v507 = vand.u32 %v506, 4294901760
        %v508 = vsub.f32 %v506, %v507
        %v509 = vand.u32 %v508, 4294901760
        %510 = vmatmul.mubr.f32.gmra.mrb[0].mxu0 %v509
        %v511 = vpop.f32.mrb[0].mxu0
        %v512 = vadd.f32 %v234, %v511
        %v513 = vpop.f32.mrb[0].mxu0
        %v514 = vadd.f32 %v234, %v513
        %515 = vmatprep.mubr.f32.mxu0 0.0
        %v516 = vand.u32 %v279, 4294901760
        %v517 = vsub.f32 %v279, %v516
        %v518 = vand.u32 %v517, 4294901760
        %v519 = vsub.f32 %v517, %v518
        %v520 = vand.u32 %v519, 4294901760
        %521 = vmatmul.mubr.f32.gmra.mrb[0].mxu0 %v520
        %v522 = vpop.f32.mrb[0].mxu0
        %v523 = vadd.f32 %v234, %v522
        %v524 = vpop.f32.mrb[0].mxu0
        %v525 = vadd.f32 %v234, %v524
        %526 = vmatprep.mubr.f32.mxu0 0.0
        %v527 = vand.u32 %v282, 4294901760
        %v528 = vsub.f32 %v282, %v527
        %v529 = vand.u32 %v528, 4294901760
        %v530 = vsub.f32 %v528, %v529
        %v531 = vand.u32 %v530, 4294901760
        %532 = vmatmul.mubr.f32.gmra.mrb[0].mxu0 %v531
        %v533 = vpop.f32.mrb[0].mxu0
        %v534 = vadd.f32 %v234, %v533
        %v535 = vpop.f32.mrb[0].mxu0
        %v536 = vadd.f32 %v234, %v535
        %537 = vmatprep.mubr.f32.mxu0 0.0
        %v538 = vand.u32 %v285, 4294901760
        %v539 = vsub.f32 %v285, %v538
        %v540 = vand.u32 %v539, 4294901760
        %v541 = vsub.f32 %v539, %v540
        %v542 = vand.u32 %v541, 4294901760
        %543 = vmatmul.mubr.f32.gmra.mrb[0].mxu0 %v542
        %v544 = vpop.f32.mrb[0].mxu0
        %v545 = vadd.f32 %v234, %v544
        %v546 = vpop.f32.mrb[0].mxu0
        %v547 = vadd.f32 %v234, %v546
        %548 = vmatprep.mubr.f32.mxu0 0.0
        %v549 = vand.u32 %v288, 4294901760
        %v550 = vsub.f32 %v288, %v549
        %v551 = vand.u32 %v550, 4294901760
        %v552 = vsub.f32 %v550, %v551
        %v553 = vand.u32 %v552, 4294901760
        %554 = vmatmul.mubr.f32.gmra.mrb[0].mxu0 %v553
        %v555 = vpop.f32.mrb[0].mxu0
        %v556 = vadd.f32 %v234, %v555
        %v557 = vpop.f32.mrb[0].mxu0
        %v558 = vadd.f32 %v234, %v557
        %559 = vmatprep.mubr.f32.mxu0 0.0
        %v560 = vand.u32 %v291, 4294901760
        %v561 = vsub.f32 %v291, %v560
        %v562 = vand.u32 %v561, 4294901760
        %v563 = vsub.f32 %v561, %v562
        %v564 = vand.u32 %v563, 4294901760
        %565 = vmatmul.mubr.f32.gmra.mrb[0].mxu0 %v564
        %v566 = vpop.f32.mrb[0].mxu0
        %v567 = vadd.f32 %v234, %v566
        %v568 = vpop.f32.mrb[0].mxu0
        %v569 = vadd.f32 %v234, %v568
        %570 = vdwg.mxu0
        %v571 = vand.u32 %v230, 4294901760
        %v572 = vsub.f32 %v230, %v571
        %v573 = vand.u32 %v572, 4294901760
        %v574 = vsub.f32 %v572, %v573
        %v575 = vand.u32 %v574, 4294901760
        %576 = vmatprep.subr.mxu0 %v575
        %v577 = vand.u32 %v229, 4294901760
        %v578 = vsub.f32 %v229, %v577
        %v579 = vand.u32 %v578, 4294901760
        %v580 = vsub.f32 %v578, %v579
        %v581 = vand.u32 %v580, 4294901760
        %582 = vmatpush1.msra.mxu0 %v581
        %v583 = vand.u32 %v232, 4294901760
        %v584 = vsub.f32 %v232, %v583
        %v585 = vand.u32 %v584, 4294901760
        %v586 = vsub.f32 %v584, %v585
        %v587 = vand.u32 %v586, 4294901760
        %588 = vmatprep.subr.mxu0 %v587
        %v589 = vand.u32 %v231, 4294901760
        %v590 = vsub.f32 %v231, %v589
        %v591 = vand.u32 %v590, 4294901760
        %v592 = vsub.f32 %v590, %v591
        %v593 = vand.u32 %v592, 4294901760
        %594 = vmatpush1.msra.mxu0 %v593
        %595 = vmatprep.subr.mxu0 0.0
        %596 = vmatpush1.msra.mxu0 0.0
        %597 = vmatprep.subr.mxu0 0.0
        %598 = vmatpush1.msra.mxu0 0.0
        %599 = vmatprep.subr.mxu0 0.0
        %600 = vmatpush1.msra.mxu0 0.0
        %601 = vmatprep.subr.mxu0 0.0
        %602 = vmatpush1.msra.mxu0 0.0
        %603 = vmatprep.subr.mxu0 0.0
        %604 = vmatpush1.msra.mxu0 0.0
        %605 = vmatprep.subr.mxu0 0.0
        %606 = vmatpush1.msra.mxu0 0.0
        %607 = vmatprep.subr.mxu0 0.0
        %608 = vmatpush1.msra.mxu0 0.0
        %609 = vmatprep.subr.mxu0 0.0
        %610 = vmatpush1.msra.mxu0 0.0
        %611 = vmatprep.subr.mxu0 0.0
        %612 = vmatpush1.msra.mxu0 0.0
        %613 = vmatprep.subr.mxu0 0.0
        %614 = vmatpush1.msra.mxu0 0.0
        %615 = vmatprep.subr.mxu0 0.0
        %616 = vmatpush1.msra.mxu0 0.0
        %617 = vmatprep.subr.mxu0 0.0
        %618 = vmatpush1.msra.mxu0 0.0
        %619 = vmatprep.subr.mxu0 0.0
        %620 = vmatpush1.msra.mxu0 0.0
        %621 = vmatprep.subr.mxu0 0.0
        %622 = vmatpush1.msra.mxu0 0.0
        %623 = vmatprep.subr.mxu0 0.0
        %624 = vmatpush1.msra.mxu0 0.0
        %625 = vmatprep.subr.mxu0 0.0
        %626 = vmatpush1.msra.mxu0 0.0
        %627 = vmatprep.subr.mxu0 0.0
        %628 = vmatpush1.msra.mxu0 0.0
        %629 = vmatprep.subr.mxu0 0.0
        %630 = vmatpush1.msra.mxu0 0.0
        %631 = vmatprep.subr.mxu0 0.0
        %632 = vmatpush1.msra.mxu0 0.0
        %633 = vmatprep.subr.mxu0 0.0
        %634 = vmatpush1.msra.mxu0 0.0
        %635 = vmatprep.subr.mxu0 0.0
        %636 = vmatpush1.msra.mxu0 0.0
        %637 = vmatprep.subr.mxu0 0.0
        %638 = vmatpush1.msra.mxu0 0.0
        %639 = vmatprep.subr.mxu0 0.0
        %640 = vmatpush1.msra.mxu0 0.0
        %641 = vmatprep.subr.mxu0 0.0
        %642 = vmatpush1.msra.mxu0 0.0
        %643 = vmatprep.subr.mxu0 0.0
        %644 = vmatpush1.msra.mxu0 0.0
        %645 = vmatprep.subr.mxu0 0.0
        %646 = vmatpush1.msra.mxu0 0.0
        %647 = vmatprep.subr.mxu0 0.0
        %648 = vmatpush1.msra.mxu0 0.0
        %649 = vmatprep.subr.mxu0 0.0
        %650 = vmatpush1.msra.mxu0 0.0
        %651 = vmatprep.subr.mxu0 0.0
        %652 = vmatpush1.msra.mxu0 0.0
        %653 = vmatprep.subr.mxu0 0.0
        %654 = vmatpush1.msra.mxu0 0.0
        %655 = vmatprep.mubr.f32.mxu0 0.0
        %v656 = vand.u32 %v237, 4294901760
        %657 = vmatmul.mubr.f32.gmra.mrb[0].mxu0 %v656
        %v658 = vpop.f32.mrb[0].mxu0
        %v659 = vadd.f32 %v369, %v658
        %v660 = vpop.f32.mrb[0].mxu0
        %v661 = vadd.f32 %v371, %v660
        %662 = vmatprep.mubr.f32.mxu0 0.0
        %v663 = vand.u32 %v240, 4294901760
        %664 = vmatmul.mubr.f32.gmra.mrb[0].mxu0 %v663
        %v665 = vpop.f32.mrb[0].mxu0
        %v666 = vadd.f32 %v380, %v665
        %v667 = vpop.f32.mrb[0].mxu0
        %v668 = vadd.f32 %v382, %v667
        %669 = vmatprep.mubr.f32.mxu0 0.0
        %v670 = vand.u32 %v243, 4294901760
        %671 = vmatmul.mubr.f32.gmra.mrb[0].mxu0 %v670
        %v672 = vpop.f32.mrb[0].mxu0
        %v673 = vadd.f32 %v391, %v672
        %v674 = vpop.f32.mrb[0].mxu0
        %v675 = vadd.f32 %v393, %v674
        %676 = vmatprep.mubr.f32.mxu0 0.0
        %v677 = vand.u32 %v246, 4294901760
        %678 = vmatmul.mubr.f32.gmra.mrb[0].mxu0 %v677
        %v679 = vpop.f32.mrb[0].mxu0
        %v680 = vadd.f32 %v402, %v679
        %v681 = vpop.f32.mrb[0].mxu0
        %v682 = vadd.f32 %v404, %v681
        %683 = vmatprep.mubr.f32.mxu0 0.0
        %v684 = vand.u32 %v249, 4294901760
        %685 = vmatmul.mubr.f32.gmra.mrb[0].mxu0 %v684
        %v686 = vpop.f32.mrb[0].mxu0
        %v687 = vadd.f32 %v413, %v686
        %v688 = vpop.f32.mrb[0].mxu0
        %v689 = vadd.f32 %v415, %v688
        %690 = vmatprep.mubr.f32.mxu0 0.0
        %v691 = vand.u32 %v252, 4294901760
        %692 = vmatmul.mubr.f32.gmra.mrb[0].mxu0 %v691
        %v693 = vpop.f32.mrb[0].mxu0
        %v694 = vadd.f32 %v424, %v693
        %v695 = vpop.f32.mrb[0].mxu0
        %v696 = vadd.f32 %v426, %v695
        %697 = vmatprep.mubr.f32.mxu0 0.0
        %v698 = vand.u32 %v255, 4294901760
        %699 = vmatmul.mubr.f32.gmra.mrb[0].mxu0 %v698
        %v700 = vpop.f32.mrb[0].mxu0
        %v701 = vadd.f32 %v435, %v700
        %v702 = vpop.f32.mrb[0].mxu0
        %v703 = vadd.f32 %v437, %v702
        %704 = vmatprep.mubr.f32.mxu0 0.0
        %v705 = vand.u32 %v258, 4294901760
        %706 = vmatmul.mubr.f32.gmra.mrb[0].mxu0 %v705
        %v707 = vpop.f32.mrb[0].mxu0
        %v708 = vadd.f32 %v446, %v707
        %v709 = vpop.f32.mrb[0].mxu0
        %v710 = vadd.f32 %v448, %v709
        %711 = vmatprep.mubr.f32.mxu0 0.0
        %v712 = vand.u32 %v261, 4294901760
        %713 = vmatmul.mubr.f32.gmra.mrb[0].mxu0 %v712
        %v714 = vpop.f32.mrb[0].mxu0
        %v715 = vadd.f32 %v457, %v714
        %v716 = vpop.f32.mrb[0].mxu0
        %v717 = vadd.f32 %v459, %v716
        %718 = vmatprep.mubr.f32.mxu0 0.0
        %v719 = vand.u32 %v264, 4294901760
        %720 = vmatmul.mubr.f32.gmra.mrb[0].mxu0 %v719
        %v721 = vpop.f32.mrb[0].mxu0
        %v722 = vadd.f32 %v468, %v721
        %v723 = vpop.f32.mrb[0].mxu0
        %v724 = vadd.f32 %v470, %v723
        %725 = vmatprep.mubr.f32.mxu0 0.0
        %v726 = vand.u32 %v267, 4294901760
        %727 = vmatmul.mubr.f32.gmra.mrb[0].mxu0 %v726
        %v728 = vpop.f32.mrb[0].mxu0
        %v729 = vadd.f32 %v479, %v728
        %v730 = vpop.f32.mrb[0].mxu0
        %v731 = vadd.f32 %v481, %v730
        %732 = vmatprep.mubr.f32.mxu0 0.0
        %v733 = vand.u32 %v270, 4294901760
        %734 = vmatmul.mubr.f32.gmra.mrb[0].mxu0 %v733
        %v735 = vpop.f32.mrb[0].mxu0
        %v736 = vadd.f32 %v490, %v735
        %v737 = vpop.f32.mrb[0].mxu0
        %v738 = vadd.f32 %v492, %v737
        %739 = vmatprep.mubr.f32.mxu0 0.0
        %v740 = vand.u32 %v273, 4294901760
        %741 = vmatmul.mubr.f32.gmra.mrb[0].mxu0 %v740
        %v742 = vpop.f32.mrb[0].mxu0
        %v743 = vadd.f32 %v501, %v742
        %v744 = vpop.f32.mrb[0].mxu0
        %v745 = vadd.f32 %v503, %v744
        %746 = vmatprep.mubr.f32.mxu0 0.0
        %v747 = vand.u32 %v276, 4294901760
        %748 = vmatmul.mubr.f32.gmra.mrb[0].mxu0 %v747
        %v749 = vpop.f32.mrb[0].mxu0
        %v750 = vadd.f32 %v512, %v749
        %v751 = vpop.f32.mrb[0].mxu0
        %v752 = vadd.f32 %v514, %v751
        %753 = vmatprep.mubr.f32.mxu0 0.0
        %v754 = vand.u32 %v279, 4294901760
        %755 = vmatmul.mubr.f32.gmra.mrb[0].mxu0 %v754
        %v756 = vpop.f32.mrb[0].mxu0
        %v757 = vadd.f32 %v523, %v756
        %v758 = vpop.f32.mrb[0].mxu0
        %v759 = vadd.f32 %v525, %v758
        %760 = vmatprep.mubr.f32.mxu0 0.0
        %v761 = vand.u32 %v282, 4294901760
        %762 = vmatmul.mubr.f32.gmra.mrb[0].mxu0 %v761
        %v763 = vpop.f32.mrb[0].mxu0
        %v764 = vadd.f32 %v534, %v763
        %v765 = vpop.f32.mrb[0].mxu0
        %v766 = vadd.f32 %v536, %v765
        %767 = vmatprep.mubr.f32.mxu0 0.0
        %v768 = vand.u32 %v285, 4294901760
        %769 = vmatmul.mubr.f32.gmra.mrb[0].mxu0 %v768
        %v770 = vpop.f32.mrb[0].mxu0
        %v771 = vadd.f32 %v545, %v770
        %v772 = vpop.f32.mrb[0].mxu0
        %v773 = vadd.f32 %v547, %v772
        %774 = vmatprep.mubr.f32.mxu0 0.0
        %v775 = vand.u32 %v288, 4294901760
        %776 = vmatmul.mubr.f32.gmra.mrb[0].mxu0 %v775
        %v777 = vpop.f32.mrb[0].mxu0
        %v778 = vadd.f32 %v556, %v777
        %v779 = vpop.f32.mrb[0].mxu0
        %v780 = vadd.f32 %v558, %v779
        %781 = vmatprep.mubr.f32.mxu0 0.0
        %v782 = vand.u32 %v291, 4294901760
        %783 = vmatmul.mubr.f32.gmra.mrb[0].mxu0 %v782
        %v784 = vpop.f32.mrb[0].mxu0
        %v785 = vadd.f32 %v567, %v784
        %v786 = vpop.f32.mrb[0].mxu0
        %v787 = vadd.f32 %v569, %v786
        %788 = vdwg.mxu0
        %v789 = vand.u32 %v230, 4294901760
        %v790 = vsub.f32 %v230, %v789
        %791 = vmatprep.subr.mxu0 %v790
        %v792 = vand.u32 %v229, 4294901760
        %v793 = vsub.f32 %v229, %v792
        %794 = vmatpush1.msra.mxu0 %v793
        %v795 = vand.u32 %v232, 4294901760
        %v796 = vsub.f32 %v232, %v795
        %797 = vmatprep.subr.mxu0 %v796
        %v798 = vand.u32 %v231, 4294901760
        %v799 = vsub.f32 %v231, %v798
        %800 = vmatpush1.msra.mxu0 %v799
        %801 = vmatprep.subr.mxu0 0.0
        %802 = vmatpush1.msra.mxu0 0.0
        %803 = vmatprep.subr.mxu0 0.0
        %804 = vmatpush1.msra.mxu0 0.0
        %805 = vmatprep.subr.mxu0 0.0
        %806 = vmatpush1.msra.mxu0 0.0
        %807 = vmatprep.subr.mxu0 0.0
        %808 = vmatpush1.msra.mxu0 0.0
        %809 = vmatprep.subr.mxu0 0.0
        %810 = vmatpush1.msra.mxu0 0.0
        %811 = vmatprep.subr.mxu0 0.0
        %812 = vmatpush1.msra.mxu0 0.0
        %813 = vmatprep.subr.mxu0 0.0
        %814 = vmatpush1.msra.mxu0 0.0
        %815 = vmatprep.subr.mxu0 0.0
        %816 = vmatpush1.msra.mxu0 0.0
        %817 = vmatprep.subr.mxu0 0.0
        %818 = vmatpush1.msra.mxu0 0.0
        %819 = vmatprep.subr.mxu0 0.0
        %820 = vmatpush1.msra.mxu0 0.0
        %821 = vmatprep.subr.mxu0 0.0
        %822 = vmatpush1.msra.mxu0 0.0
        %823 = vmatprep.subr.mxu0 0.0
        %824 = vmatpush1.msra.mxu0 0.0
        %825 = vmatprep.subr.mxu0 0.0
        %826 = vmatpush1.msra.mxu0 0.0
        %827 = vmatprep.subr.mxu0 0.0
        %828 = vmatpush1.msra.mxu0 0.0
        %829 = vmatprep.subr.mxu0 0.0
        %830 = vmatpush1.msra.mxu0 0.0
        %831 = vmatprep.subr.mxu0 0.0
        %832 = vmatpush1.msra.mxu0 0.0
        %833 = vmatprep.subr.mxu0 0.0
        %834 = vmatpush1.msra.mxu0 0.0
        %835 = vmatprep.subr.mxu0 0.0
        %836 = vmatpush1.msra.mxu0 0.0
        %837 = vmatprep.subr.mxu0 0.0
        %838 = vmatpush1.msra.mxu0 0.0
        %839 = vmatprep.subr.mxu0 0.0
        %840 = vmatpush1.msra.mxu0 0.0
        %841 = vmatprep.subr.mxu0 0.0
        %842 = vmatpush1.msra.mxu0 0.0
        %843 = vmatprep.subr.mxu0 0.0
        %844 = vmatpush1.msra.mxu0 0.0
        %845 = vmatprep.subr.mxu0 0.0
        %846 = vmatpush1.msra.mxu0 0.0
        %847 = vmatprep.subr.mxu0 0.0
        %848 = vmatpush1.msra.mxu0 0.0
        %849 = vmatprep.subr.mxu0 0.0
        %850 = vmatpush1.msra.mxu0 0.0
        %851 = vmatprep.subr.mxu0 0.0
        %852 = vmatpush1.msra.mxu0 0.0
        %853 = vmatprep.subr.mxu0 0.0
        %854 = vmatpush1.msra.mxu0 0.0
        %855 = vmatprep.subr.mxu0 0.0
        %856 = vmatpush1.msra.mxu0 0.0
        %857 = vmatprep.subr.mxu0 0.0
        %858 = vmatpush1.msra.mxu0 0.0
        %859 = vmatprep.subr.mxu0 0.0
        %860 = vmatpush1.msra.mxu0 0.0
        %861 = vmatprep.mubr.f32.mxu0 0.0
        %v862 = vand.u32 %v237, 4294901760
        %v863 = vsub.f32 %v237, %v862
        %864 = vmatmul.mubr.f32.gmra.mrb[0].mxu0 %v863
        %v865 = vpop.f32.mrb[0].mxu0
        %v866 = vadd.f32 %v659, %v865
        %v867 = vpop.f32.mrb[0].mxu0
        %v868 = vadd.f32 %v661, %v867
        %869 = vmatprep.mubr.f32.mxu0 0.0
        %v870 = vand.u32 %v240, 4294901760
        %v871 = vsub.f32 %v240, %v870
        %872 = vmatmul.mubr.f32.gmra.mrb[0].mxu0 %v871
        %v873 = vpop.f32.mrb[0].mxu0
        %v874 = vadd.f32 %v666, %v873
        %v875 = vpop.f32.mrb[0].mxu0
        %v876 = vadd.f32 %v668, %v875
        %877 = vmatprep.mubr.f32.mxu0 0.0
        %v878 = vand.u32 %v243, 4294901760
        %v879 = vsub.f32 %v243, %v878
        %880 = vmatmul.mubr.f32.gmra.mrb[0].mxu0 %v879
        %v881 = vpop.f32.mrb[0].mxu0
        %v882 = vadd.f32 %v673, %v881
        %v883 = vpop.f32.mrb[0].mxu0
        %v884 = vadd.f32 %v675, %v883
        %885 = vmatprep.mubr.f32.mxu0 0.0
        %v886 = vand.u32 %v246, 4294901760
        %v887 = vsub.f32 %v246, %v886
        %888 = vmatmul.mubr.f32.gmra.mrb[0].mxu0 %v887
        %v889 = vpop.f32.mrb[0].mxu0
        %v890 = vadd.f32 %v680, %v889
        %v891 = vpop.f32.mrb[0].mxu0
        %v892 = vadd.f32 %v682, %v891
        %893 = vmatprep.mubr.f32.mxu0 0.0
        %v894 = vand.u32 %v249, 4294901760
        %v895 = vsub.f32 %v249, %v894
        %896 = vmatmul.mubr.f32.gmra.mrb[0].mxu0 %v895
        %v897 = vpop.f32.mrb[0].mxu0
        %v898 = vadd.f32 %v687, %v897
        %v899 = vpop.f32.mrb[0].mxu0
        %v900 = vadd.f32 %v689, %v899
        %901 = vmatprep.mubr.f32.mxu0 0.0
        %v902 = vand.u32 %v252, 4294901760
        %v903 = vsub.f32 %v252, %v902
        %904 = vmatmul.mubr.f32.gmra.mrb[0].mxu0 %v903
        %v905 = vpop.f32.mrb[0].mxu0
        %v906 = vadd.f32 %v694, %v905
        %v907 = vpop.f32.mrb[0].mxu0
        %v908 = vadd.f32 %v696, %v907
        %909 = vmatprep.mubr.f32.mxu0 0.0
        %v910 = vand.u32 %v255, 4294901760
        %v911 = vsub.f32 %v255, %v910
        %912 = vmatmul.mubr.f32.gmra.mrb[0].mxu0 %v911
        %v913 = vpop.f32.mrb[0].mxu0
        %v914 = vadd.f32 %v701, %v913
        %v915 = vpop.f32.mrb[0].mxu0
        %v916 = vadd.f32 %v703, %v915
        %917 = vmatprep.mubr.f32.mxu0 0.0
        %v918 = vand.u32 %v258, 4294901760
        %v919 = vsub.f32 %v258, %v918
        %920 = vmatmul.mubr.f32.gmra.mrb[0].mxu0 %v919
        %v921 = vpop.f32.mrb[0].mxu0
        %v922 = vadd.f32 %v708, %v921
        %v923 = vpop.f32.mrb[0].mxu0
        %v924 = vadd.f32 %v710, %v923
        %925 = vmatprep.mubr.f32.mxu0 0.0
        %v926 = vand.u32 %v261, 4294901760
        %v927 = vsub.f32 %v261, %v926
        %928 = vmatmul.mubr.f32.gmra.mrb[0].mxu0 %v927
        %v929 = vpop.f32.mrb[0].mxu0
        %v930 = vadd.f32 %v715, %v929
        %v931 = vpop.f32.mrb[0].mxu0
        %v932 = vadd.f32 %v717, %v931
        %933 = vmatprep.mubr.f32.mxu0 0.0
        %v934 = vand.u32 %v264, 4294901760
        %v935 = vsub.f32 %v264, %v934
        %936 = vmatmul.mubr.f32.gmra.mrb[0].mxu0 %v935
        %v937 = vpop.f32.mrb[0].mxu0
        %v938 = vadd.f32 %v722, %v937
        %v939 = vpop.f32.mrb[0].mxu0
        %v940 = vadd.f32 %v724, %v939
        %941 = vmatprep.mubr.f32.mxu0 0.0
        %v942 = vand.u32 %v267, 4294901760
        %v943 = vsub.f32 %v267, %v942
        %944 = vmatmul.mubr.f32.gmra.mrb[0].mxu0 %v943
        %v945 = vpop.f32.mrb[0].mxu0
        %v946 = vadd.f32 %v729, %v945
        %v947 = vpop.f32.mrb[0].mxu0
        %v948 = vadd.f32 %v731, %v947
        %949 = vmatprep.mubr.f32.mxu0 0.0
        %v950 = vand.u32 %v270, 4294901760
        %v951 = vsub.f32 %v270, %v950
        %952 = vmatmul.mubr.f32.gmra.mrb[0].mxu0 %v951
        %v953 = vpop.f32.mrb[0].mxu0
        %v954 = vadd.f32 %v736, %v953
        %v955 = vpop.f32.mrb[0].mxu0
        %v956 = vadd.f32 %v738, %v955
        %957 = vmatprep.mubr.f32.mxu0 0.0
        %v958 = vand.u32 %v273, 4294901760
        %v959 = vsub.f32 %v273, %v958
        %960 = vmatmul.mubr.f32.gmra.mrb[0].mxu0 %v959
        %v961 = vpop.f32.mrb[0].mxu0
        %v962 = vadd.f32 %v743, %v961
        %v963 = vpop.f32.mrb[0].mxu0
        %v964 = vadd.f32 %v745, %v963
        %965 = vmatprep.mubr.f32.mxu0 0.0
        %v966 = vand.u32 %v276, 4294901760
        %v967 = vsub.f32 %v276, %v966
        %968 = vmatmul.mubr.f32.gmra.mrb[0].mxu0 %v967
        %v969 = vpop.f32.mrb[0].mxu0
        %v970 = vadd.f32 %v750, %v969
        %v971 = vpop.f32.mrb[0].mxu0
        %v972 = vadd.f32 %v752, %v971
        %973 = vmatprep.mubr.f32.mxu0 0.0
        %v974 = vand.u32 %v279, 4294901760
        %v975 = vsub.f32 %v279, %v974
        %976 = vmatmul.mubr.f32.gmra.mrb[0].mxu0 %v975
        %v977 = vpop.f32.mrb[0].mxu0
        %v978 = vadd.f32 %v757, %v977
        %v979 = vpop.f32.mrb[0].mxu0
        %v980 = vadd.f32 %v759, %v979
        %981 = vmatprep.mubr.f32.mxu0 0.0
        %v982 = vand.u32 %v282, 4294901760
        %v983 = vsub.f32 %v282, %v982
        %984 = vmatmul.mubr.f32.gmra.mrb[0].mxu0 %v983
        %v985 = vpop.f32.mrb[0].mxu0
        %v986 = vadd.f32 %v764, %v985
        %v987 = vpop.f32.mrb[0].mxu0
        %v988 = vadd.f32 %v766, %v987
        %989 = vmatprep.mubr.f32.mxu0 0.0
        %v990 = vand.u32 %v285, 4294901760
        %v991 = vsub.f32 %v285, %v990
        %992 = vmatmul.mubr.f32.gmra.mrb[0].mxu0 %v991
        %v993 = vpop.f32.mrb[0].mxu0
        %v994 = vadd.f32 %v771, %v993
        %v995 = vpop.f32.mrb[0].mxu0
        %v996 = vadd.f32 %v773, %v995
        %997 = vmatprep.mubr.f32.mxu0 0.0
        %v998 = vand.u32 %v288, 4294901760
        %v999 = vsub.f32 %v288, %v998
        %1000 = vmatmul.mubr.f32.gmra.mrb[0].mxu0 %v999
        %v1001 = vpop.f32.mrb[0].mxu0
        %v1002 = vadd.f32 %v778, %v1001
        %v1003 = vpop.f32.mrb[0].mxu0
        %v1004 = vadd.f32 %v780, %v1003
        %1005 = vmatprep.mubr.f32.mxu0 0.0
        %v1006 = vand.u32 %v291, 4294901760
        %v1007 = vsub.f32 %v291, %v1006
        %1008 = vmatmul.mubr.f32.gmra.mrb[0].mxu0 %v1007
        %v1009 = vpop.f32.mrb[0].mxu0
        %v1010 = vadd.f32 %v785, %v1009
        %v1011 = vpop.f32.mrb[0].mxu0
        %v1012 = vadd.f32 %v787, %v1011
        %1013 = vdwg.mxu0
        %v1014 = vand.u32 %v230, 4294901760
        %1015 = vmatprep.subr.mxu0 %v1014
        %v1016 = vand.u32 %v229, 4294901760
        %1017 = vmatpush1.msra.mxu0 %v1016
        %v1018 = vand.u32 %v232, 4294901760
        %1019 = vmatprep.subr.mxu0 %v1018
        %v1020 = vand.u32 %v231, 4294901760
        %1021 = vmatpush1.msra.mxu0 %v1020
        %1022 = vmatprep.subr.mxu0 0.0
        %1023 = vmatpush1.msra.mxu0 0.0
        %1024 = vmatprep.subr.mxu0 0.0
        %1025 = vmatpush1.msra.mxu0 0.0
        %1026 = vmatprep.subr.mxu0 0.0
        %1027 = vmatpush1.msra.mxu0 0.0
        %1028 = vmatprep.subr.mxu0 0.0
        %1029 = vmatpush1.msra.mxu0 0.0
        %1030 = vmatprep.subr.mxu0 0.0
        %1031 = vmatpush1.msra.mxu0 0.0
        %1032 = vmatprep.subr.mxu0 0.0
        %1033 = vmatpush1.msra.mxu0 0.0
        %1034 = vmatprep.subr.mxu0 0.0
        %1035 = vmatpush1.msra.mxu0 0.0
        %1036 = vmatprep.subr.mxu0 0.0
        %1037 = vmatpush1.msra.mxu0 0.0
        %1038 = vmatprep.subr.mxu0 0.0
        %1039 = vmatpush1.msra.mxu0 0.0
        %1040 = vmatprep.subr.mxu0 0.0
        %1041 = vmatpush1.msra.mxu0 0.0
        %1042 = vmatprep.subr.mxu0 0.0
        %1043 = vmatpush1.msra.mxu0 0.0
        %1044 = vmatprep.subr.mxu0 0.0
        %1045 = vmatpush1.msra.mxu0 0.0
        %1046 = vmatprep.subr.mxu0 0.0
        %1047 = vmatpush1.msra.mxu0 0.0
        %1048 = vmatprep.subr.mxu0 0.0
        %1049 = vmatpush1.msra.mxu0 0.0
        %1050 = vmatprep.subr.mxu0 0.0
        %1051 = vmatpush1.msra.mxu0 0.0
        %1052 = vmatprep.subr.mxu0 0.0
        %1053 = vmatpush1.msra.mxu0 0.0
        %1054 = vmatprep.subr.mxu0 0.0
        %1055 = vmatpush1.msra.mxu0 0.0
        %1056 = vmatprep.subr.mxu0 0.0
        %1057 = vmatpush1.msra.mxu0 0.0
        %1058 = vmatprep.subr.mxu0 0.0
        %1059 = vmatpush1.msra.mxu0 0.0
        %1060 = vmatprep.subr.mxu0 0.0
        %1061 = vmatpush1.msra.mxu0 0.0
        %1062 = vmatprep.subr.mxu0 0.0
        %1063 = vmatpush1.msra.mxu0 0.0
        %1064 = vmatprep.subr.mxu0 0.0
        %1065 = vmatpush1.msra.mxu0 0.0
        %1066 = vmatprep.subr.mxu0 0.0
        %1067 = vmatpush1.msra.mxu0 0.0
        %1068 = vmatprep.subr.mxu0 0.0
        %1069 = vmatpush1.msra.mxu0 0.0
        %1070 = vmatprep.subr.mxu0 0.0
        %1071 = vmatpush1.msra.mxu0 0.0
        %1072 = vmatprep.subr.mxu0 0.0
        %1073 = vmatpush1.msra.mxu0 0.0
        %1074 = vmatprep.subr.mxu0 0.0
        %1075 = vmatpush1.msra.mxu0 0.0
        %1076 = vmatprep.subr.mxu0 0.0
        %1077 = vmatpush1.msra.mxu0 0.0
        %1078 = vmatprep.subr.mxu0 0.0
        %1079 = vmatpush1.msra.mxu0 0.0
        %1080 = vmatprep.subr.mxu0 0.0
        %1081 = vmatpush1.msra.mxu0 0.0
        %1082 = vmatprep.mubr.f32.mxu0 0.0
        %v1083 = vand.u32 %v237, 4294901760
        %v1084 = vsub.f32 %v237, %v1083
        %v1085 = vand.u32 %v1084, 4294901760
        %1086 = vmatmul.mubr.f32.gmra.mrb[0].mxu0 %v1085
        %v1087 = vpop.f32.mrb[0].mxu0
        %v1088 = vadd.f32 %v866, %v1087
        %v1089 = vpop.f32.mrb[0].mxu0
        %v1090 = vadd.f32 %v868, %v1089
        %1091 = vmatprep.mubr.f32.mxu0 0.0
        %v1092 = vand.u32 %v240, 4294901760
        %v1093 = vsub.f32 %v240, %v1092
        %v1094 = vand.u32 %v1093, 4294901760
        %1095 = vmatmul.mubr.f32.gmra.mrb[0].mxu0 %v1094
        %v1096 = vpop.f32.mrb[0].mxu0
        %v1097 = vadd.f32 %v874, %v1096
        %v1098 = vpop.f32.mrb[0].mxu0
        %v1099 = vadd.f32 %v876, %v1098
        %1100 = vmatprep.mubr.f32.mxu0 0.0
        %v1101 = vand.u32 %v243, 4294901760
        %v1102 = vsub.f32 %v243, %v1101
        %v1103 = vand.u32 %v1102, 4294901760
        %1104 = vmatmul.mubr.f32.gmra.mrb[0].mxu0 %v1103
        %v1105 = vpop.f32.mrb[0].mxu0
        %v1106 = vadd.f32 %v882, %v1105
        %v1107 = vpop.f32.mrb[0].mxu0
        %v1108 = vadd.f32 %v884, %v1107
        %1109 = vmatprep.mubr.f32.mxu0 0.0
        %v1110 = vand.u32 %v246, 4294901760
        %v1111 = vsub.f32 %v246, %v1110
        %v1112 = vand.u32 %v1111, 4294901760
        %1113 = vmatmul.mubr.f32.gmra.mrb[0].mxu0 %v1112
        %v1114 = vpop.f32.mrb[0].mxu0
        %v1115 = vadd.f32 %v890, %v1114
        %v1116 = vpop.f32.mrb[0].mxu0
        %v1117 = vadd.f32 %v892, %v1116
        %1118 = vmatprep.mubr.f32.mxu0 0.0
        %v1119 = vand.u32 %v249, 4294901760
        %v1120 = vsub.f32 %v249, %v1119
        %v1121 = vand.u32 %v1120, 4294901760
        %1122 = vmatmul.mubr.f32.gmra.mrb[0].mxu0 %v1121
        %v1123 = vpop.f32.mrb[0].mxu0
        %v1124 = vadd.f32 %v898, %v1123
        %v1125 = vpop.f32.mrb[0].mxu0
        %v1126 = vadd.f32 %v900, %v1125
        %1127 = vmatprep.mubr.f32.mxu0 0.0
        %v1128 = vand.u32 %v252, 4294901760
        %v1129 = vsub.f32 %v252, %v1128
        %v1130 = vand.u32 %v1129, 4294901760
        %1131 = vmatmul.mubr.f32.gmra.mrb[0].mxu0 %v1130
        %v1132 = vpop.f32.mrb[0].mxu0
        %v1133 = vadd.f32 %v906, %v1132
        %v1134 = vpop.f32.mrb[0].mxu0
        %v1135 = vadd.f32 %v908, %v1134
        %1136 = vmatprep.mubr.f32.mxu0 0.0
        %v1137 = vand.u32 %v255, 4294901760
        %v1138 = vsub.f32 %v255, %v1137
        %v1139 = vand.u32 %v1138, 4294901760
        %1140 = vmatmul.mubr.f32.gmra.mrb[0].mxu0 %v1139
        %v1141 = vpop.f32.mrb[0].mxu0
        %v1142 = vadd.f32 %v914, %v1141
        %v1143 = vpop.f32.mrb[0].mxu0
        %v1144 = vadd.f32 %v916, %v1143
        %1145 = vmatprep.mubr.f32.mxu0 0.0
        %v1146 = vand.u32 %v258, 4294901760
        %v1147 = vsub.f32 %v258, %v1146
        %v1148 = vand.u32 %v1147, 4294901760
        %1149 = vmatmul.mubr.f32.gmra.mrb[0].mxu0 %v1148
        %v1150 = vpop.f32.mrb[0].mxu0
        %v1151 = vadd.f32 %v922, %v1150
        %v1152 = vpop.f32.mrb[0].mxu0
        %v1153 = vadd.f32 %v924, %v1152
        %1154 = vmatprep.mubr.f32.mxu0 0.0
        %v1155 = vand.u32 %v261, 4294901760
        %v1156 = vsub.f32 %v261, %v1155
        %v1157 = vand.u32 %v1156, 4294901760
        %1158 = vmatmul.mubr.f32.gmra.mrb[0].mxu0 %v1157
        %v1159 = vpop.f32.mrb[0].mxu0
        %v1160 = vadd.f32 %v930, %v1159
        %v1161 = vpop.f32.mrb[0].mxu0
        %v1162 = vadd.f32 %v932, %v1161
        %1163 = vmatprep.mubr.f32.mxu0 0.0
        %v1164 = vand.u32 %v264, 4294901760
        %v1165 = vsub.f32 %v264, %v1164
        %v1166 = vand.u32 %v1165, 4294901760
        %1167 = vmatmul.mubr.f32.gmra.mrb[0].mxu0 %v1166
        %v1168 = vpop.f32.mrb[0].mxu0
        %v1169 = vadd.f32 %v938, %v1168
        %v1170 = vpop.f32.mrb[0].mxu0
        %v1171 = vadd.f32 %v940, %v1170
        %1172 = vmatprep.mubr.f32.mxu0 0.0
        %v1173 = vand.u32 %v267, 4294901760
        %v1174 = vsub.f32 %v267, %v1173
        %v1175 = vand.u32 %v1174, 4294901760
        %1176 = vmatmul.mubr.f32.gmra.mrb[0].mxu0 %v1175
        %v1177 = vpop.f32.mrb[0].mxu0
        %v1178 = vadd.f32 %v946, %v1177
        %v1179 = vpop.f32.mrb[0].mxu0
        %v1180 = vadd.f32 %v948, %v1179
        %1181 = vmatprep.mubr.f32.mxu0 0.0
        %v1182 = vand.u32 %v270, 4294901760
        %v1183 = vsub.f32 %v270, %v1182
        %v1184 = vand.u32 %v1183, 4294901760
        %1185 = vmatmul.mubr.f32.gmra.mrb[0].mxu0 %v1184
        %v1186 = vpop.f32.mrb[0].mxu0
        %v1187 = vadd.f32 %v954, %v1186
        %v1188 = vpop.f32.mrb[0].mxu0
        %v1189 = vadd.f32 %v956, %v1188
        %1190 = vmatprep.mubr.f32.mxu0 0.0
        %v1191 = vand.u32 %v273, 4294901760
        %v1192 = vsub.f32 %v273, %v1191
        %v1193 = vand.u32 %v1192, 4294901760
        %1194 = vmatmul.mubr.f32.gmra.mrb[0].mxu0 %v1193
        %v1195 = vpop.f32.mrb[0].mxu0
        %v1196 = vadd.f32 %v962, %v1195
        %v1197 = vpop.f32.mrb[0].mxu0
        %v1198 = vadd.f32 %v964, %v1197
        %1199 = vmatprep.mubr.f32.mxu0 0.0
        %v1200 = vand.u32 %v276, 4294901760
        %v1201 = vsub.f32 %v276, %v1200
        %v1202 = vand.u32 %v1201, 4294901760
        %1203 = vmatmul.mubr.f32.gmra.mrb[0].mxu0 %v1202
        %v1204 = vpop.f32.mrb[0].mxu0
        %v1205 = vadd.f32 %v970, %v1204
        %v1206 = vpop.f32.mrb[0].mxu0
        %v1207 = vadd.f32 %v972, %v1206
        %1208 = vmatprep.mubr.f32.mxu0 0.0
        %v1209 = vand.u32 %v279, 4294901760
        %v1210 = vsub.f32 %v279, %v1209
        %v1211 = vand.u32 %v1210, 4294901760
        %1212 = vmatmul.mubr.f32.gmra.mrb[0].mxu0 %v1211
        %v1213 = vpop.f32.mrb[0].mxu0
        %v1214 = vadd.f32 %v978, %v1213
        %v1215 = vpop.f32.mrb[0].mxu0
        %v1216 = vadd.f32 %v980, %v1215
        %1217 = vmatprep.mubr.f32.mxu0 0.0
        %v1218 = vand.u32 %v282, 4294901760
        %v1219 = vsub.f32 %v282, %v1218
        %v1220 = vand.u32 %v1219, 4294901760
        %1221 = vmatmul.mubr.f32.gmra.mrb[0].mxu0 %v1220
        %v1222 = vpop.f32.mrb[0].mxu0
        %v1223 = vadd.f32 %v986, %v1222
        %v1224 = vpop.f32.mrb[0].mxu0
        %v1225 = vadd.f32 %v988, %v1224
        %1226 = vmatprep.mubr.f32.mxu0 0.0
        %v1227 = vand.u32 %v285, 4294901760
        %v1228 = vsub.f32 %v285, %v1227
        %v1229 = vand.u32 %v1228, 4294901760
        %1230 = vmatmul.mubr.f32.gmra.mrb[0].mxu0 %v1229
        %v1231 = vpop.f32.mrb[0].mxu0
        %v1232 = vadd.f32 %v994, %v1231
        %v1233 = vpop.f32.mrb[0].mxu0
        %v1234 = vadd.f32 %v996, %v1233
        %1235 = vmatprep.mubr.f32.mxu0 0.0
        %v1236 = vand.u32 %v288, 4294901760
        %v1237 = vsub.f32 %v288, %v1236
        %v1238 = vand.u32 %v1237, 4294901760
        %1239 = vmatmul.mubr.f32.gmra.mrb[0].mxu0 %v1238
        %v1240 = vpop.f32.mrb[0].mxu0
        %v1241 = vadd.f32 %v1002, %v1240
        %v1242 = vpop.f32.mrb[0].mxu0
        %v1243 = vadd.f32 %v1004, %v1242
        %1244 = vmatprep.mubr.f32.mxu0 0.0
        %v1245 = vand.u32 %v291, 4294901760
        %v1246 = vsub.f32 %v291, %v1245
        %v1247 = vand.u32 %v1246, 4294901760
        %1248 = vmatmul.mubr.f32.gmra.mrb[0].mxu0 %v1247
        %v1249 = vpop.f32.mrb[0].mxu0
        %v1250 = vadd.f32 %v1010, %v1249
        %v1251 = vpop.f32.mrb[0].mxu0
        %v1252 = vadd.f32 %v1012, %v1251
        %1253 = vdwg.mxu0
        %v1254 = vand.u32 %v230, 4294901760
        %v1255 = vsub.f32 %v230, %v1254
        %v1256 = vand.u32 %v1255, 4294901760
        %1257 = vmatprep.subr.mxu0 %v1256
        %v1258 = vand.u32 %v229, 4294901760
        %v1259 = vsub.f32 %v229, %v1258
        %v1260 = vand.u32 %v1259, 4294901760
        %1261 = vmatpush1.msra.mxu0 %v1260
        %v1262 = vand.u32 %v232, 4294901760
        %v1263 = vsub.f32 %v232, %v1262
        %v1264 = vand.u32 %v1263, 4294901760
        %1265 = vmatprep.subr.mxu0 %v1264
        %v1266 = vand.u32 %v231, 4294901760
        %v1267 = vsub.f32 %v231, %v1266
        %v1268 = vand.u32 %v1267, 4294901760
        %1269 = vmatpush1.msra.mxu0 %v1268
        %1270 = vmatprep.subr.mxu0 0.0
        %1271 = vmatpush1.msra.mxu0 0.0
        %1272 = vmatprep.subr.mxu0 0.0
        %1273 = vmatpush1.msra.mxu0 0.0
        %1274 = vmatprep.subr.mxu0 0.0
        %1275 = vmatpush1.msra.mxu0 0.0
        %1276 = vmatprep.subr.mxu0 0.0
        %1277 = vmatpush1.msra.mxu0 0.0
        %1278 = vmatprep.subr.mxu0 0.0
        %1279 = vmatpush1.msra.mxu0 0.0
        %1280 = vmatprep.subr.mxu0 0.0
        %1281 = vmatpush1.msra.mxu0 0.0
        %1282 = vmatprep.subr.mxu0 0.0
        %1283 = vmatpush1.msra.mxu0 0.0
        %1284 = vmatprep.subr.mxu0 0.0
        %1285 = vmatpush1.msra.mxu0 0.0
        %1286 = vmatprep.subr.mxu0 0.0
        %1287 = vmatpush1.msra.mxu0 0.0
        %1288 = vmatprep.subr.mxu0 0.0
        %1289 = vmatpush1.msra.mxu0 0.0
        %1290 = vmatprep.subr.mxu0 0.0
        %1291 = vmatpush1.msra.mxu0 0.0
        %1292 = vmatprep.subr.mxu0 0.0
        %1293 = vmatpush1.msra.mxu0 0.0
        %1294 = vmatprep.subr.mxu0 0.0
        %1295 = vmatpush1.msra.mxu0 0.0
        %1296 = vmatprep.subr.mxu0 0.0
        %1297 = vmatpush1.msra.mxu0 0.0
        %1298 = vmatprep.subr.mxu0 0.0
        %1299 = vmatpush1.msra.mxu0 0.0
        %1300 = vmatprep.subr.mxu0 0.0
        %1301 = vmatpush1.msra.mxu0 0.0
        %1302 = vmatprep.subr.mxu0 0.0
        %1303 = vmatpush1.msra.mxu0 0.0
        %1304 = vmatprep.subr.mxu0 0.0
        %1305 = vmatpush1.msra.mxu0 0.0
        %1306 = vmatprep.subr.mxu0 0.0
        %1307 = vmatpush1.msra.mxu0 0.0
        %1308 = vmatprep.subr.mxu0 0.0
        %1309 = vmatpush1.msra.mxu0 0.0
        %1310 = vmatprep.subr.mxu0 0.0
        %1311 = vmatpush1.msra.mxu0 0.0
        %1312 = vmatprep.subr.mxu0 0.0
        %1313 = vmatpush1.msra.mxu0 0.0
        %1314 = vmatprep.subr.mxu0 0.0
        %1315 = vmatpush1.msra.mxu0 0.0
        %1316 = vmatprep.subr.mxu0 0.0
        %1317 = vmatpush1.msra.mxu0 0.0
        %1318 = vmatprep.subr.mxu0 0.0
        %1319 = vmatpush1.msra.mxu0 0.0
        %1320 = vmatprep.subr.mxu0 0.0
        %1321 = vmatpush1.msra.mxu0 0.0
        %1322 = vmatprep.subr.mxu0 0.0
        %1323 = vmatpush1.msra.mxu0 0.0
        %1324 = vmatprep.subr.mxu0 0.0
        %1325 = vmatpush1.msra.mxu0 0.0
        %1326 = vmatprep.subr.mxu0 0.0
        %1327 = vmatpush1.msra.mxu0 0.0
        %1328 = vmatprep.subr.mxu0 0.0
        %1329 = vmatpush1.msra.mxu0 0.0
        %1330 = vmatprep.mubr.f32.mxu0 0.0
        %v1331 = vand.u32 %v237, 4294901760
        %1332 = vmatmul.mubr.f32.gmra.mrb[0].mxu0 %v1331
        %v1333 = vpop.f32.mrb[0].mxu0
        %v1334 = vadd.f32 %v1088, %v1333
        %v1335 = vpop.f32.mrb[0].mxu0
        %v1336 = vadd.f32 %v1090, %v1335
        %1337 = vmatprep.mubr.f32.mxu0 0.0
        %v1338 = vand.u32 %v240, 4294901760
        %1339 = vmatmul.mubr.f32.gmra.mrb[0].mxu0 %v1338
        %v1340 = vpop.f32.mrb[0].mxu0
        %v1341 = vadd.f32 %v1097, %v1340
        %v1342 = vpop.f32.mrb[0].mxu0
        %v1343 = vadd.f32 %v1099, %v1342
        %1344 = vmatprep.mubr.f32.mxu0 0.0
        %v1345 = vand.u32 %v243, 4294901760
        %1346 = vmatmul.mubr.f32.gmra.mrb[0].mxu0 %v1345
        %v1347 = vpop.f32.mrb[0].mxu0
        %v1348 = vadd.f32 %v1106, %v1347
        %v1349 = vpop.f32.mrb[0].mxu0
        %v1350 = vadd.f32 %v1108, %v1349
        %1351 = vmatprep.mubr.f32.mxu0 0.0
        %v1352 = vand.u32 %v246, 4294901760
        %1353 = vmatmul.mubr.f32.gmra.mrb[0].mxu0 %v1352
        %v1354 = vpop.f32.mrb[0].mxu0
        %v1355 = vadd.f32 %v1115, %v1354
        %v1356 = vpop.f32.mrb[0].mxu0
        %v1357 = vadd.f32 %v1117, %v1356
        %1358 = vmatprep.mubr.f32.mxu0 0.0
        %v1359 = vand.u32 %v249, 4294901760
        %1360 = vmatmul.mubr.f32.gmra.mrb[0].mxu0 %v1359
        %v1361 = vpop.f32.mrb[0].mxu0
        %v1362 = vadd.f32 %v1124, %v1361
        %v1363 = vpop.f32.mrb[0].mxu0
        %v1364 = vadd.f32 %v1126, %v1363
        %1365 = vmatprep.mubr.f32.mxu0 0.0
        %v1366 = vand.u32 %v252, 4294901760
        %1367 = vmatmul.mubr.f32.gmra.mrb[0].mxu0 %v1366
        %v1368 = vpop.f32.mrb[0].mxu0
        %v1369 = vadd.f32 %v1133, %v1368
        %v1370 = vpop.f32.mrb[0].mxu0
        %v1371 = vadd.f32 %v1135, %v1370
        %1372 = vmatprep.mubr.f32.mxu0 0.0
        %v1373 = vand.u32 %v255, 4294901760
        %1374 = vmatmul.mubr.f32.gmra.mrb[0].mxu0 %v1373
        %v1375 = vpop.f32.mrb[0].mxu0
        %v1376 = vadd.f32 %v1142, %v1375
        %v1377 = vpop.f32.mrb[0].mxu0
        %v1378 = vadd.f32 %v1144, %v1377
        %1379 = vmatprep.mubr.f32.mxu0 0.0
        %v1380 = vand.u32 %v258, 4294901760
        %1381 = vmatmul.mubr.f32.gmra.mrb[0].mxu0 %v1380
        %v1382 = vpop.f32.mrb[0].mxu0
        %v1383 = vadd.f32 %v1151, %v1382
        %v1384 = vpop.f32.mrb[0].mxu0
        %v1385 = vadd.f32 %v1153, %v1384
        %1386 = vmatprep.mubr.f32.mxu0 0.0
        %v1387 = vand.u32 %v261, 4294901760
        %1388 = vmatmul.mubr.f32.gmra.mrb[0].mxu0 %v1387
        %v1389 = vpop.f32.mrb[0].mxu0
        %v1390 = vadd.f32 %v1160, %v1389
        %v1391 = vpop.f32.mrb[0].mxu0
        %v1392 = vadd.f32 %v1162, %v1391
        %1393 = vmatprep.mubr.f32.mxu0 0.0
        %v1394 = vand.u32 %v264, 4294901760
        %1395 = vmatmul.mubr.f32.gmra.mrb[0].mxu0 %v1394
        %v1396 = vpop.f32.mrb[0].mxu0
        %v1397 = vadd.f32 %v1169, %v1396
        %v1398 = vpop.f32.mrb[0].mxu0
        %v1399 = vadd.f32 %v1171, %v1398
        %1400 = vmatprep.mubr.f32.mxu0 0.0
        %v1401 = vand.u32 %v267, 4294901760
        %1402 = vmatmul.mubr.f32.gmra.mrb[0].mxu0 %v1401
        %v1403 = vpop.f32.mrb[0].mxu0
        %v1404 = vadd.f32 %v1178, %v1403
        %v1405 = vpop.f32.mrb[0].mxu0
        %v1406 = vadd.f32 %v1180, %v1405
        %1407 = vmatprep.mubr.f32.mxu0 0.0
        %v1408 = vand.u32 %v270, 4294901760
        %1409 = vmatmul.mubr.f32.gmra.mrb[0].mxu0 %v1408
        %v1410 = vpop.f32.mrb[0].mxu0
        %v1411 = vadd.f32 %v1187, %v1410
        %v1412 = vpop.f32.mrb[0].mxu0
        %v1413 = vadd.f32 %v1189, %v1412
        %1414 = vmatprep.mubr.f32.mxu0 0.0
        %v1415 = vand.u32 %v273, 4294901760
        %1416 = vmatmul.mubr.f32.gmra.mrb[0].mxu0 %v1415
        %v1417 = vpop.f32.mrb[0].mxu0
        %v1418 = vadd.f32 %v1196, %v1417
        %v1419 = vpop.f32.mrb[0].mxu0
        %v1420 = vadd.f32 %v1198, %v1419
        %1421 = vmatprep.mubr.f32.mxu0 0.0
        %v1422 = vand.u32 %v276, 4294901760
        %1423 = vmatmul.mubr.f32.gmra.mrb[0].mxu0 %v1422
        %v1424 = vpop.f32.mrb[0].mxu0
        %v1425 = vadd.f32 %v1205, %v1424
        %v1426 = vpop.f32.mrb[0].mxu0
        %v1427 = vadd.f32 %v1207, %v1426
        %1428 = vmatprep.mubr.f32.mxu0 0.0
        %v1429 = vand.u32 %v279, 4294901760
        %1430 = vmatmul.mubr.f32.gmra.mrb[0].mxu0 %v1429
        %v1431 = vpop.f32.mrb[0].mxu0
        %v1432 = vadd.f32 %v1214, %v1431
        %v1433 = vpop.f32.mrb[0].mxu0
        %v1434 = vadd.f32 %v1216, %v1433
        %1435 = vmatprep.mubr.f32.mxu0 0.0
        %v1436 = vand.u32 %v282, 4294901760
        %1437 = vmatmul.mubr.f32.gmra.mrb[0].mxu0 %v1436
        %v1438 = vpop.f32.mrb[0].mxu0
        %v1439 = vadd.f32 %v1223, %v1438
        %v1440 = vpop.f32.mrb[0].mxu0
        %v1441 = vadd.f32 %v1225, %v1440
        %1442 = vmatprep.mubr.f32.mxu0 0.0
        %v1443 = vand.u32 %v285, 4294901760
        %1444 = vmatmul.mubr.f32.gmra.mrb[0].mxu0 %v1443
        %v1445 = vpop.f32.mrb[0].mxu0
        %v1446 = vadd.f32 %v1232, %v1445
        %v1447 = vpop.f32.mrb[0].mxu0
        %v1448 = vadd.f32 %v1234, %v1447
        %1449 = vmatprep.mubr.f32.mxu0 0.0
        %v1450 = vand.u32 %v288, 4294901760
        %1451 = vmatmul.mubr.f32.gmra.mrb[0].mxu0 %v1450
        %v1452 = vpop.f32.mrb[0].mxu0
        %v1453 = vadd.f32 %v1241, %v1452
        %v1454 = vpop.f32.mrb[0].mxu0
        %v1455 = vadd.f32 %v1243, %v1454
        %1456 = vmatprep.mubr.f32.mxu0 0.0
        %v1457 = vand.u32 %v291, 4294901760
        %1458 = vmatmul.mubr.f32.gmra.mrb[0].mxu0 %v1457
        %v1459 = vpop.f32.mrb[0].mxu0
        %v1460 = vadd.f32 %v1250, %v1459
        %v1461 = vpop.f32.mrb[0].mxu0
        %v1462 = vadd.f32 %v1252, %v1461
        %1463 = vdwg.mxu0
        %v1464 = vand.u32 %v230, 4294901760
        %1465 = vmatprep.subr.mxu0 %v1464
        %v1466 = vand.u32 %v229, 4294901760
        %1467 = vmatpush1.msra.mxu0 %v1466
        %v1468 = vand.u32 %v232, 4294901760
        %1469 = vmatprep.subr.mxu0 %v1468
        %v1470 = vand.u32 %v231, 4294901760
        %1471 = vmatpush1.msra.mxu0 %v1470
        %1472 = vmatprep.subr.mxu0 0.0
        %1473 = vmatpush1.msra.mxu0 0.0
        %1474 = vmatprep.subr.mxu0 0.0
        %1475 = vmatpush1.msra.mxu0 0.0
        %1476 = vmatprep.subr.mxu0 0.0
        %1477 = vmatpush1.msra.mxu0 0.0
        %1478 = vmatprep.subr.mxu0 0.0
        %1479 = vmatpush1.msra.mxu0 0.0
        %1480 = vmatprep.subr.mxu0 0.0
        %1481 = vmatpush1.msra.mxu0 0.0
        %1482 = vmatprep.subr.mxu0 0.0
        %1483 = vmatpush1.msra.mxu0 0.0
        %1484 = vmatprep.subr.mxu0 0.0
        %1485 = vmatpush1.msra.mxu0 0.0
        %1486 = vmatprep.subr.mxu0 0.0
        %1487 = vmatpush1.msra.mxu0 0.0
        %1488 = vmatprep.subr.mxu0 0.0
        %1489 = vmatpush1.msra.mxu0 0.0
        %1490 = vmatprep.subr.mxu0 0.0
        %1491 = vmatpush1.msra.mxu0 0.0
        %1492 = vmatprep.subr.mxu0 0.0
        %1493 = vmatpush1.msra.mxu0 0.0
        %1494 = vmatprep.subr.mxu0 0.0
        %1495 = vmatpush1.msra.mxu0 0.0
        %1496 = vmatprep.subr.mxu0 0.0
        %1497 = vmatpush1.msra.mxu0 0.0
        %1498 = vmatprep.subr.mxu0 0.0
        %1499 = vmatpush1.msra.mxu0 0.0
        %1500 = vmatprep.subr.mxu0 0.0
        %1501 = vmatpush1.msra.mxu0 0.0
        %1502 = vmatprep.subr.mxu0 0.0
        %1503 = vmatpush1.msra.mxu0 0.0
        %1504 = vmatprep.subr.mxu0 0.0
        %1505 = vmatpush1.msra.mxu0 0.0
        %1506 = vmatprep.subr.mxu0 0.0
        %1507 = vmatpush1.msra.mxu0 0.0
        %1508 = vmatprep.subr.mxu0 0.0
        %1509 = vmatpush1.msra.mxu0 0.0
        %1510 = vmatprep.subr.mxu0 0.0
        %1511 = vmatpush1.msra.mxu0 0.0
        %1512 = vmatprep.subr.mxu0 0.0
        %1513 = vmatpush1.msra.mxu0 0.0
        %1514 = vmatprep.subr.mxu0 0.0
        %1515 = vmatpush1.msra.mxu0 0.0
        %1516 = vmatprep.subr.mxu0 0.0
        %1517 = vmatpush1.msra.mxu0 0.0
        %1518 = vmatprep.subr.mxu0 0.0
        %1519 = vmatpush1.msra.mxu0 0.0
        %1520 = vmatprep.subr.mxu0 0.0
        %1521 = vmatpush1.msra.mxu0 0.0
        %1522 = vmatprep.subr.mxu0 0.0
        %1523 = vmatpush1.msra.mxu0 0.0
        %1524 = vmatprep.subr.mxu0 0.0
        %1525 = vmatpush1.msra.mxu0 0.0
        %1526 = vmatprep.subr.mxu0 0.0
        %1527 = vmatpush1.msra.mxu0 0.0
        %1528 = vmatprep.subr.mxu0 0.0
        %1529 = vmatpush1.msra.mxu0 0.0
        %1530 = vmatprep.subr.mxu0 0.0
        %1531 = vmatpush1.msra.mxu0 0.0
        %1532 = vmatprep.mubr.f32.mxu0 0.0
        %v1533 = vand.u32 %v237, 4294901760
        %1534 = vmatmul.mubr.f32.gmra.mrb[0].mxu0 %v1533
        %v1535 = vpop.f32.mrb[0].mxu0
        %v1536 = vadd.f32 %v1334, %v1535
        %v1537 = vpop.f32.mrb[0].mxu0
        %v1538 = vadd.f32 %v1336, %v1537
        %1539 = vmatprep.mubr.f32.mxu0 0.0
        %v1540 = vand.u32 %v240, 4294901760
        %1541 = vmatmul.mubr.f32.gmra.mrb[0].mxu0 %v1540
        %v1542 = vpop.f32.mrb[0].mxu0
        %v1543 = vadd.f32 %v1341, %v1542
        %v1544 = vpop.f32.mrb[0].mxu0
        %v1545 = vadd.f32 %v1343, %v1544
        %1546 = vmatprep.mubr.f32.mxu0 0.0
        %v1547 = vand.u32 %v243, 4294901760
        %1548 = vmatmul.mubr.f32.gmra.mrb[0].mxu0 %v1547
        %v1549 = vpop.f32.mrb[0].mxu0
        %v1550 = vadd.f32 %v1348, %v1549
        %v1551 = vpop.f32.mrb[0].mxu0
        %v1552 = vadd.f32 %v1350, %v1551
        %1553 = vmatprep.mubr.f32.mxu0 0.0
        %v1554 = vand.u32 %v246, 4294901760
        %1555 = vmatmul.mubr.f32.gmra.mrb[0].mxu0 %v1554
        %v1556 = vpop.f32.mrb[0].mxu0
        %v1557 = vadd.f32 %v1355, %v1556
        %v1558 = vpop.f32.mrb[0].mxu0
        %v1559 = vadd.f32 %v1357, %v1558
        %1560 = vmatprep.mubr.f32.mxu0 0.0
        %v1561 = vand.u32 %v249, 4294901760
        %1562 = vmatmul.mubr.f32.gmra.mrb[0].mxu0 %v1561
        %v1563 = vpop.f32.mrb[0].mxu0
        %v1564 = vadd.f32 %v1362, %v1563
        %v1565 = vpop.f32.mrb[0].mxu0
        %v1566 = vadd.f32 %v1364, %v1565
        %1567 = vmatprep.mubr.f32.mxu0 0.0
        %v1568 = vand.u32 %v252, 4294901760
        %1569 = vmatmul.mubr.f32.gmra.mrb[0].mxu0 %v1568
        %v1570 = vpop.f32.mrb[0].mxu0
        %v1571 = vadd.f32 %v1369, %v1570
        %v1572 = vpop.f32.mrb[0].mxu0
        %v1573 = vadd.f32 %v1371, %v1572
        %1574 = vmatprep.mubr.f32.mxu0 0.0
        %v1575 = vand.u32 %v255, 4294901760
        %1576 = vmatmul.mubr.f32.gmra.mrb[0].mxu0 %v1575
        %v1577 = vpop.f32.mrb[0].mxu0
        %v1578 = vadd.f32 %v1376, %v1577
        %v1579 = vpop.f32.mrb[0].mxu0
        %v1580 = vadd.f32 %v1378, %v1579
        %1581 = vmatprep.mubr.f32.mxu0 0.0
        %v1582 = vand.u32 %v258, 4294901760
        %1583 = vmatmul.mubr.f32.gmra.mrb[0].mxu0 %v1582
        %v1584 = vpop.f32.mrb[0].mxu0
        %v1585 = vadd.f32 %v1383, %v1584
        %v1586 = vpop.f32.mrb[0].mxu0
        %v1587 = vadd.f32 %v1385, %v1586
        %1588 = vmatprep.mubr.f32.mxu0 0.0
        %v1589 = vand.u32 %v261, 4294901760
        %1590 = vmatmul.mubr.f32.gmra.mrb[0].mxu0 %v1589
        %v1591 = vpop.f32.mrb[0].mxu0
        %v1592 = vadd.f32 %v1390, %v1591
        %v1593 = vpop.f32.mrb[0].mxu0
        %v1594 = vadd.f32 %v1392, %v1593
        %1595 = vmatprep.mubr.f32.mxu0 0.0
        %v1596 = vand.u32 %v264, 4294901760
        %1597 = vmatmul.mubr.f32.gmra.mrb[0].mxu0 %v1596
        %v1598 = vpop.f32.mrb[0].mxu0
        %v1599 = vadd.f32 %v1397, %v1598
        %v1600 = vpop.f32.mrb[0].mxu0
        %v1601 = vadd.f32 %v1399, %v1600
        %1602 = vmatprep.mubr.f32.mxu0 0.0
        %v1603 = vand.u32 %v267, 4294901760
        %1604 = vmatmul.mubr.f32.gmra.mrb[0].mxu0 %v1603
        %v1605 = vpop.f32.mrb[0].mxu0
        %v1606 = vadd.f32 %v1404, %v1605
        %v1607 = vpop.f32.mrb[0].mxu0
        %v1608 = vadd.f32 %v1406, %v1607
        %1609 = vmatprep.mubr.f32.mxu0 0.0
        %v1610 = vand.u32 %v270, 4294901760
        %1611 = vmatmul.mubr.f32.gmra.mrb[0].mxu0 %v1610
        %v1612 = vpop.f32.mrb[0].mxu0
        %v1613 = vadd.f32 %v1411, %v1612
        %v1614 = vpop.f32.mrb[0].mxu0
        %v1615 = vadd.f32 %v1413, %v1614
        %1616 = vmatprep.mubr.f32.mxu0 0.0
        %v1617 = vand.u32 %v273, 4294901760
        %1618 = vmatmul.mubr.f32.gmra.mrb[0].mxu0 %v1617
        %v1619 = vpop.f32.mrb[0].mxu0
        %v1620 = vadd.f32 %v1418, %v1619
        %v1621 = vpop.f32.mrb[0].mxu0
        %v1622 = vadd.f32 %v1420, %v1621
        %1623 = vmatprep.mubr.f32.mxu0 0.0
        %v1624 = vand.u32 %v276, 4294901760
        %1625 = vmatmul.mubr.f32.gmra.mrb[0].mxu0 %v1624
        %v1626 = vpop.f32.mrb[0].mxu0
        %v1627 = vadd.f32 %v1425, %v1626
        %v1628 = vpop.f32.mrb[0].mxu0
        %v1629 = vadd.f32 %v1427, %v1628
        %1630 = vmatprep.mubr.f32.mxu0 0.0
        %v1631 = vand.u32 %v279, 4294901760
        %1632 = vmatmul.mubr.f32.gmra.mrb[0].mxu0 %v1631
        %v1633 = vpop.f32.mrb[0].mxu0
        %v1634 = vadd.f32 %v1432, %v1633
        %v1635 = vpop.f32.mrb[0].mxu0
        %v1636 = vadd.f32 %v1434, %v1635
        %1637 = vmatprep.mubr.f32.mxu0 0.0
        %v1638 = vand.u32 %v282, 4294901760
        %1639 = vmatmul.mubr.f32.gmra.mrb[0].mxu0 %v1638
        %v1640 = vpop.f32.mrb[0].mxu0
        %v1641 = vadd.f32 %v1439, %v1640
        %v1642 = vpop.f32.mrb[0].mxu0
        %v1643 = vadd.f32 %v1441, %v1642
        %1644 = vmatprep.mubr.f32.mxu0 0.0
        %v1645 = vand.u32 %v285, 4294901760
        %1646 = vmatmul.mubr.f32.gmra.mrb[0].mxu0 %v1645
        %v1647 = vpop.f32.mrb[0].mxu0
        %v1648 = vadd.f32 %v1446, %v1647
        %v1649 = vpop.f32.mrb[0].mxu0
        %v1650 = vadd.f32 %v1448, %v1649
        %1651 = vmatprep.mubr.f32.mxu0 0.0
        %v1652 = vand.u32 %v288, 4294901760
        %1653 = vmatmul.mubr.f32.gmra.mrb[0].mxu0 %v1652
        %v1654 = vpop.f32.mrb[0].mxu0
        %v1655 = vadd.f32 %v1453, %v1654
        %v1656 = vpop.f32.mrb[0].mxu0
        %v1657 = vadd.f32 %v1455, %v1656
        %1658 = vmatprep.mubr.f32.mxu0 0.0
        %v1659 = vand.u32 %v291, 4294901760
        %1660 = vmatmul.mubr.f32.gmra.mrb[0].mxu0 %v1659
        %v1661 = vpop.f32.mrb[0].mxu0
        %v1662 = vadd.f32 %v1460, %v1661
        %v1663 = vpop.f32.mrb[0].mxu0
        %v1664 = vadd.f32 %v1462, %v1663
        %1665 = vdwg.mxu0
        %v1666 = vmul.f32 %v1536, 1.442695
        %v1667 = vpow.pop %v1666
        %v1668 = vmul.f32 %v1538, 1.442695
        %v1669 = vpow.pop %v1668
        %v1670 = vmul.f32 %v1543, 1.442695
        %v1671 = vpow.pop %v1670
        %v1672 = vmul.f32 %v1545, 1.442695
        %v1673 = vpow.pop %v1672
        %v1674 = vmul.f32 %v1550, 1.442695
        %v1675 = vpow.pop %v1674
        %v1676 = vmul.f32 %v1552, 1.442695
        %v1677 = vpow.pop %v1676
        %v1678 = vmul.f32 %v1557, 1.442695
        %v1679 = vpow.pop %v1678
        %v1680 = vmul.f32 %v1559, 1.442695
        %v1681 = vpow.pop %v1680
        %v1682 = vmul.f32 %v1564, 1.442695
        %v1683 = vpow.pop %v1682
        %v1684 = vmul.f32 %v1566, 1.442695
        %v1685 = vpow.pop %v1684
        %v1686 = vmul.f32 %v1571, 1.442695
        %v1687 = vpow.pop %v1686
        %v1688 = vmul.f32 %v1573, 1.442695
        %v1689 = vpow.pop %v1688
        %v1690 = vmul.f32 %v1578, 1.442695
        %v1691 = vpow.pop %v1690
        %v1692 = vmul.f32 %v1580, 1.442695
        %v1693 = vpow.pop %v1692
        %v1694 = vmul.f32 %v1585, 1.442695
        %v1695 = vpow.pop %v1694
        %v1696 = vmul.f32 %v1587, 1.442695
        %v1697 = vpow.pop %v1696
        %v1698 = vmul.f32 %v1592, 1.442695
        %v1699 = vpow.pop %v1698
        %v1700 = vmul.f32 %v1594, 1.442695
        %v1701 = vpow.pop %v1700
        %v1702 = vmul.f32 %v1599, 1.442695
        %v1703 = vpow.pop %v1702
        %v1704 = vmul.f32 %v1601, 1.442695
        %v1705 = vpow.pop %v1704
        %v1706 = vmul.f32 %v1606, 1.442695
        %v1707 = vpow.pop %v1706
        %v1708 = vmul.f32 %v1608, 1.442695
        %v1709 = vpow.pop %v1708
        %v1710 = vmul.f32 %v1613, 1.442695
        %v1711 = vpow.pop %v1710
        %v1712 = vmul.f32 %v1615, 1.442695
        %v1713 = vpow.pop %v1712
        %v1714 = vmul.f32 %v1620, 1.442695
        %v1715 = vpow.pop %v1714
        %v1716 = vmul.f32 %v1622, 1.442695
        %v1717 = vpow.pop %v1716
        %v1718 = vmul.f32 %v1627, 1.442695
        %v1719 = vpow.pop %v1718
        %v1720 = vmul.f32 %v1629, 1.442695
        %v1721 = vpow.pop %v1720
        %v1722 = vmul.f32 %v1634, 1.442695
        %v1723 = vpow.pop %v1722
        %v1724 = vmul.f32 %v1636, 1.442695
        %v1725 = vpow.pop %v1724
        %v1726 = vmul.f32 %v1641, 1.442695
        %v1727 = vpow.pop %v1726
        %v1728 = vmul.f32 %v1643, 1.442695
        %v1729 = vpow.pop %v1728
        %v1730 = vmul.f32 %v1648, 1.442695
        %v1731 = vpow.pop %v1730
        %v1732 = vmul.f32 %v1650, 1.442695
        %v1733 = vpow.pop %v1732
        %v1734 = vmul.f32 %v1655, 1.442695
        %v1735 = vpow.pop %v1734
        %v1736 = vmul.f32 %v1657, 1.442695
        %v1737 = vpow.pop %v1736
        %v1738 = vmul.f32 %v1662, 1.442695
        %v1739 = vpow.pop %v1738
        %v1740 = vmul.f32 %v1664, 1.442695
        %v1741 = vpow.pop %v1740
        %1742 = vst [vmem:[%s195] sm:$0xff] %v1667
        %1743 = vst [vmem:[%s195 + $0x8] sm:$0xff] %v1669
        %1744 = vst [vmem:[%s195 + $0x10] sm:$0xff] %v1671
        %1745 = vst [vmem:[%s195 + $0x18] sm:$0xff] %v1673
        %1746 = vst [vmem:[%s195 + $0x20] sm:$0xff] %v1675
        %1747 = vst [vmem:[%s195 + $0x28] sm:$0xff] %v1677
        %1748 = vst [vmem:[%s195 + $0x30] sm:$0xff] %v1679
        %1749 = vst [vmem:[%s195 + $0x38] sm:$0xff] %v1681
        %1750 = vst [vmem:[%s195 + $0x40] sm:$0xff] %v1683
        %1751 = vst [vmem:[%s195 + $0x48] sm:$0xff] %v1685
        %1752 = vst [vmem:[%s195 + $0x50] sm:$0xff] %v1687
        %1753 = vst [vmem:[%s195 + $0x58] sm:$0xff] %v1689
        %1754 = vst [vmem:[%s195 + $0x60] sm:$0xff] %v1691
        %1755 = vst [vmem:[%s195 + $0x68] sm:$0xff] %v1693
        %1756 = vst [vmem:[%s195 + $0x70] sm:$0xff] %v1695
        %1757 = vst [vmem:[%s195 + $0x78] sm:$0xff] %v1697
        %1758 = vst [vmem:[%s195 + $0x80] sm:$0xff] %v1699
        %1759 = vst [vmem:[%s195 + $0x88] sm:$0xff] %v1701
        %1760 = vst [vmem:[%s195 + $0x90] sm:$0xff] %v1703
        %1761 = vst [vmem:[%s195 + $0x98] sm:$0xff] %v1705
        %1762 = vst [vmem:[%s195 + $0xa0] sm:$0xff] %v1707
        %1763 = vst [vmem:[%s195 + $0xa8] sm:$0xff] %v1709
        %1764 = vst [vmem:[%s195 + $0xb0] sm:$0xff] %v1711
        %1765 = vst [vmem:[%s195 + $0xb8] sm:$0xff] %v1713
        %1766 = vst [vmem:[%s195 + $0xc0] sm:$0xff] %v1715
        %1767 = vst [vmem:[%s195 + $0xc8] sm:$0xff] %v1717
        %1768 = vst [vmem:[%s195 + $0xd0] sm:$0xff] %v1719
        %1769 = vst [vmem:[%s195 + $0xd8] sm:$0xff] %v1721
        %1770 = vst [vmem:[%s195 + $0xe0] sm:$0xff] %v1723
        %1771 = vst [vmem:[%s195 + $0xe8] sm:$0xff] %v1725
        %1772 = vst [vmem:[%s195 + $0xf0] sm:$0xff] %v1727
        %1773 = vst [vmem:[%s195 + $0xf8] sm:$0xff] %v1729
        %1774 = vst [vmem:[%s195 + $0x100] sm:$0xff] %v1731
        %1775 = vst [vmem:[%s195 + $0x108] sm:$0xff] %v1733
        %1776 = vst [vmem:[%s195 + $0x110] sm:$0xff] %v1735
        %1777 = vst [vmem:[%s195 + $0x118] sm:$0xff] %v1737
        %1778 = vst [vmem:[%s195 + $0x120] sm:$0xff] %v1739
        %1779 = vst [vmem:[%s195 + $0x128] sm:$0xff] %v1741
        %s1780 = sand.u32 %s113, 1
        %s1781 = scalar_lea.sflag [#allocation4], %s1780
        %s1782 = sand.u32 %s113, 1
        %s1783 = smul.addr %s1782, 304
        %s1784 = scalar_lea.vmem [#allocation3], %s1783
        // Predicated region
        $region33: #{tpu_custom_call.1} parent=31 // pred_check
          %p1785 = pneg %p123
        $region34: #{tpu_custom_call.1} parent=31 // pred_check_branch
          %1787 = sbr.rel (%p1785) target = $region36
        $region35: #{tpu_custom_call.1} parent=31 // pred_region
          %s1788 = smul.u32 19, %s22
          %s1789 = smul.u32 2, %s23
          %s1791 = ssub.s32 4864, 4864
          %1792 = vsyncadd %s1781, %s1791
          %s1793 = smul.addr %s1788, 2
          %s1794 = sadd.s32 %s1789, %s1793
          %s1795 = smul.addr %s1794, 128
          %s1796 = scalar_lea.hbm %s3, %s1795
          %s1797 = sshll.u32 %s1784, 4
          %s1798 = int_to_ptr.vmem [resolvable:$true] %s1797
          %1803 = dma.vmem_to_hbm [thread:$0]  %s1798, 4864, %s1796, %s1781, 256, 256, 16
        $region36: #{tpu_custom_call.1} parent=31 // pred_fallthru
          _
      $region32: #{tpu_custom_call.1} parent=5 // pred_fallthru
        _
      %p1804 = scmp.le.s32.totalorder 2, %s13
      // Predicated region
      $region37: #{tpu_custom_call.1} parent=5 // pred_check
        %p1805 = pneg %p1804
      $region38: #{tpu_custom_call.1} parent=5 // pred_check_branch
        %1807 = sbr.rel (%p1805) target = $region40
      $region39: #{tpu_custom_call.1} parent=5 // pred_region
        %s1808 = ssub.s32 %s13, 2
        // Predicated region
        $region41: #{tpu_custom_call.1} parent=39 // pred_check
          %p1809 = pneg %p129
        $region42: #{tpu_custom_call.1} parent=39 // pred_check_branch
          %1811 = sbr.rel (%p1809) target = $region44
        $region43: #{tpu_custom_call.1} parent=39 // pred_region
          %s1812 = sand.u32 %s114, 1
          %s1813 = scalar_lea.sflag [#allocation4], %s1812
          %s1814 = sand.u32 %s114, 1
          %s1815 = smul.addr %s1814, 304
          %s1816 = scalar_lea.vmem [#allocation3], %s1815
          %1817 = dma.done %s1813, 4864
        $region44: #{tpu_custom_call.1} parent=39 // pred_fallthru
          _
      $region40: #{tpu_custom_call.1} parent=5 // pred_fallthru
        _
    $region6: #{tpu_custom_call.1} parent=1 // loop_footer
      %s17 = sadd.s32 1, %s13
    $region7: #{tpu_custom_call.1} parent=1 // loop_footer_branch
      %12 = sbr.rel target = $region3
    $region8: #{tpu_custom_call.1} parent=1 // loop_exit
      _
    %1818 = vsyncpa [#allocation4], 1
    %s1819 = scalar_lea.sflag [#allocation4], 1
    %1820 = vsyncpa %s1819, 1

</llo_original>
